<compile_context>
chip_gen: v5e
topology: v5e:2x2
jax: 0.10.0
libtpu: 0.0.40
codegen_flags: <defaults>
</compile_context>

<pallas_src>
import jax
import jax.numpy as jnp
from jax.experimental import pallas as pl
from jax.experimental.pallas import tpu as pltpu


def _round_up(x, m):
    return (x + m - 1) // m * m


def _cdiv(a, b):
    return (a + b - 1) // b


def _chip_info():
    """(has_two_tensorcores, is_v5e) with conservative fallbacks."""
    kind = ""
    try:
        kind = jax.devices()[0].device_kind.lower()
    except Exception:
        pass
    two_tc = "v7" in kind                                   # v7x: 2 TC / chip
    is_v5e = ("v5e" in kind) or ("v5 lite" in kind) or ("v5lite" in kind)
    return two_tc, is_v5e


# --------------------------------------------------------------------------
# Kernel: fully fused 3-layer MLP (Linear+ReLU, Linear+ReLU, Linear)
# --------------------------------------------------------------------------
def generator_kernel(x_ref, w1_ref, b1_ref, w2_ref, b2_ref, w3_ref, b3_ref,
                     o_ref):
    # ---- layer 1 (concat already fused on host into x): bf16 MXU, f32 acc
    h1 = jnp.dot(x_ref[...], w1_ref[...], preferred_element_type=jnp.float32)
    h1 = jnp.maximum(h1 + b1_ref[...], 0.0)          # bias + ReLU in f32 (VPU)

    # ---- layer 2
    h2 = jnp.dot(h1.astype(jnp.bfloat16), w2_ref[...],
                 preferred_element_type=jnp.float32)
    h2 = jnp.maximum(h2 + b2_ref[...], 0.0)

    # ---- layer 3 (output, lane-dense padded to a multiple of 128 columns)
    h3 = jnp.dot(h2.astype(jnp.bfloat16), w3_ref[...],
                 preferred_element_type=jnp.float32)
    o_ref[...] = (h3 + b3_ref[...]).astype(o_ref.dtype)


# --------------------------------------------------------------------------
# One-time parameter preparation (hoisted out of the per-call forward)
# --------------------------------------------------------------------------
def prepare_generator_params(params):
    """Cast weights to bf16 MXU operands, reshape biases to (1, N) f32, and
    zero-pad the output layer to a lane-dense multiple of 128 columns.
    Call once at init; reuse the result for every forward call."""
    w1, b1, w2, b2, w3, b3 = params
    emb_dim = w3.shape[1]
    emb_pad = _round_up(emb_dim, 128)

    def _bias(b, pad=0):
        b = jnp.asarray(b, jnp.float32).reshape(1, -1)   # accept (N,) or (1,N)
        if pad:
            b = jnp.pad(b, ((0, 0), (0, pad)))
        return b

    return dict(
        w1=jnp.asarray(w1, jnp.bfloat16),                       # (in_dim, 512)
        b1=_bias(b1),
        w2=jnp.asarray(w2, jnp.bfloat16),                       # (512, 1024)
        b2=_bias(b2),
        w3=jnp.pad(jnp.asarray(w3, jnp.float32),
                   ((0, 0), (0, emb_pad - emb_dim))).astype(jnp.bfloat16),
        b3=_bias(b3, emb_pad - emb_dim),
        emb_dim=emb_dim,
        emb_pad=emb_pad,
    )


# --------------------------------------------------------------------------
# Forward wrapper
# --------------------------------------------------------------------------
def generator_forward(latent, labels, prepared, *, bm=None,
                      out_dtype=jnp.float32):
    """latent: (B, latent_dim), labels: (B, label_dim) -> (B, embedding_dim)."""
    B, latent_dim = latent.shape
    _, label_dim = labels.shape
    in_dim = latent_dim + label_dim

    w1, b1 = prepared["w1"], prepared["b1"]
    w2, b2 = prepared["w2"], prepared["b2"]
    w3, b3 = prepared["w3"], prepared["b3"]
    emb_dim, emb_pad = prepared["emb_dim"], prepared["emb_pad"]
    assert w1.shape[0] == in_dim
    h1_dim = w1.shape[1]
    h2_dim = w2.shape[1]

    two_tc, is_v5e = _chip_info()
    if bm is None:
        # v5e: cap at 512 to stay well inside the 16 MiB default scoped VMEM;
        # v6e/v7x: 1024 rows (~12 MiB resident) fits the 32 MiB default.
        bm = 512 if is_v5e else 1024

    # ---- batch tiling (generation-aware)
    if two_tc and _round_up(B, 16) >= 256:
        # v7x: force an even number of grid steps so both TensorCores get work.
        steps = max(2, 2 * _cdiv(B, 2 * bm))
        bm_eff = _round_up(_cdiv(B, steps), 16)
        Bp = bm_eff * steps
    else:
        # single-TC (v5e/v6e): keep the biggest tile / fewest steps.
        bm_eff = _round_up(min(bm, _round_up(B, 16)), 16)
        Bp = _round_up(B, bm_eff)
    grid = (Bp // bm_eff,)

    # ---- per-call host prep: only the (cheap) activation concat/cast/pad.
    x = jnp.concatenate([latent, labels], axis=1).astype(jnp.bfloat16)
    if Bp != B:
        # NOTE: padded rows propagate relu(bias) values through all three
        # layers; they are finite garbage and are sliced off below — do NOT
        # rely on padded rows being zero.
        x = jnp.pad(x, ((0, Bp - B), (0, 0)))

    # Constant-index weight/bias specs: one resident VMEM copy (no re-DMA).
    def _weight_spec(shape):
        return pl.BlockSpec(shape, lambda i: (0, 0),
                            pipeline_mode=pl.Buffered(1))

    out_bytes = jnp.dtype(out_dtype).itemsize
    flops = 2 * Bp * (in_dim * h1_dim + h1_dim * h2_dim + h2_dim * emb_pad)
    bytes_accessed = (
        2 * Bp * in_dim                                              # bf16 input
        + 2 * (in_dim * h1_dim + h1_dim * h2_dim + h2_dim * emb_pad)  # weights
        + 4 * (h1_dim + h2_dim + emb_pad)                             # biases
        + out_bytes * Bp * emb_pad)                                   # output
    cost = pl.CostEstimate(flops=flops, transcendentals=0,
                           bytes_accessed=bytes_accessed)

    out = pl.pallas_call(
        generator_kernel,
        out_shape=jax.ShapeDtypeStruct((Bp, emb_pad), out_dtype),
        grid_spec=pltpu.PrefetchScalarGridSpec(
            num_scalar_prefetch=0,
            grid=grid,
            in_specs=[
                # activations: tiled along batch, double-buffered (default)
                pl.BlockSpec((bm_eff, in_dim), lambda i: (i, 0)),
                # weights / biases: full arrays, single-buffered, resident
                _weight_spec((in_dim, h1_dim)),
                _weight_spec((1, h1_dim)),
                _weight_spec((h1_dim, h2_dim)),
                _weight_spec((1, h2_dim)),
                _weight_spec((h2_dim, emb_pad)),
                _weight_spec((1, emb_pad)),
            ],
            out_specs=pl.BlockSpec((bm_eff, emb_pad), lambda i: (i, 0)),
        ),
        compiler_params=pltpu.CompilerParams(
            dimension_semantics=("parallel",)),
        cost_estimate=cost,
    )(x, w1, b1, w2, b2, w3, b3)

    return out[:B, :emb_dim]


# --------------------------------------------------------------------------
# Init + pure-JAX reference (for validation)
# --------------------------------------------------------------------------
def init_generator_params(key, latent_dim, label_dim, embedding_dim):
    """Deterministic init matching nn.Linear's default U(-1/sqrt(fan_in), ...)."""
    dims = [(latent_dim + label_dim, 512), (512, 1024), (1024, embedding_dim)]
    params = []
    for (fan_in, fan_out) in dims:
        key, kw, kb = jax.random.split(key, 3)
        bound = 1.0 / (fan_in ** 0.5)
        w = jax.random.uniform(kw, (fan_in, fan_out), jnp.float32,
                               minval=-bound, maxval=bound)
        b = jax.random.uniform(kb, (1, fan_out), jnp.float32,
                               minval=-bound, maxval=bound)
        params += [w, b]
    return tuple(params)


def generator_ref(latent, labels, params):
    """Pure-JAX f32 reference of the PyTorch forward."""
    w1, b1, w2, b2, w3, b3 = params
    x = jnp.concatenate([latent, labels], axis=1)
    h = jnp.maximum(x @ w1 + b1, 0.0)
    h = jnp.maximum(h @ w2 + b2, 0.0)
    return h @ w3 + b3


if __name__ == "__main__":
    latent_dim, label_dim, embedding_dim = 32, 16, 64
    batch = 8

    key = jax.random.PRNGKey(0)
    key, k_lat, k_lab = jax.random.split(key, 3)
    latent = jax.random.normal(k_lat, (batch, latent_dim), jnp.float32)
    labels = jax.random.normal(k_lab, (batch, label_dim), jnp.float32)

    params = init_generator_params(key, latent_dim, label_dim, embedding_dim)
    prepared = prepare_generator_params(params)        # one-time weight prep

    out = generator_forward(latent, labels, prepared)
    out = jax.block_until_ready(out)

    ref = generator_ref(latent, labels, params)
    assert out.shape == (batch, embedding_dim)
    # bf16 MXU inputs with f32 accumulation: loosen tolerance vs. f32 reference.
    assert jnp.allclose(out, ref, atol=5e-2, rtol=5e-2), float(
        jnp.max(jnp.abs(out - ref)))

    print("KERNEL_OK")
</pallas_src>

<mosaic_0001>
module attributes {stable_mosaic.version = 11 : i64} {
  func.func @generator_kernel(%arg0: i32, %arg1: memref<16x48xbf16, #tpu.memory_space<vmem>>, %arg2: memref<48x512xbf16, #tpu.memory_space<vmem>>, %arg3: memref<1x512xf32, #tpu.memory_space<vmem>>, %arg4: memref<512x1024xbf16, #tpu.memory_space<vmem>>, %arg5: memref<1x1024xf32, #tpu.memory_space<vmem>>, %arg6: memref<1024x128xbf16, #tpu.memory_space<vmem>>, %arg7: memref<1x128xf32, #tpu.memory_space<vmem>>, %arg8: memref<16x128xf32, #tpu.memory_space<vmem>>) attributes {dimension_semantics = [#tpu.dimension_semantics<parallel>], iteration_bounds = array<i64: 1>, scalar_prefetch = 0 : i64, scratch_operands = 0 : i64, tpu.core_type = #tpu.core_type<tc>, window_params = [{transform_indices = @transform_0, window_bounds = array<i64: 16, 48>}, {pipeline_mode = #tpu.pipeline_mode<synchronous>, transform_indices = @transform_1, window_bounds = array<i64: 48, 512>}, {pipeline_mode = #tpu.pipeline_mode<synchronous>, transform_indices = @transform_2, window_bounds = array<i64: 1, 512>}, {pipeline_mode = #tpu.pipeline_mode<synchronous>, transform_indices = @transform_3, window_bounds = array<i64: 512, 1024>}, {pipeline_mode = #tpu.pipeline_mode<synchronous>, transform_indices = @transform_4, window_bounds = array<i64: 1, 1024>}, {pipeline_mode = #tpu.pipeline_mode<synchronous>, transform_indices = @transform_5, window_bounds = array<i64: 1024, 128>}, {pipeline_mode = #tpu.pipeline_mode<synchronous>, transform_indices = @transform_6, window_bounds = array<i64: 1, 128>}, {transform_indices = @transform_7, window_bounds = array<i64: 16, 128>}]} {
    %c0 = arith.constant 0 : index
    %c0_0 = arith.constant 0 : index
    %0 = vector.load %arg1[%c0, %c0_0] : memref<16x48xbf16, #tpu.memory_space<vmem>>, vector<16x48xbf16>
    %c0_1 = arith.constant 0 : index
    %c0_2 = arith.constant 0 : index
    %1 = vector.load %arg2[%c0_1, %c0_2] : memref<48x512xbf16, #tpu.memory_space<vmem>>, vector<48x512xbf16>
    %cst = arith.constant dense<0.000000e+00> : vector<16x512xf32>
    %2 = tpu.matmul %0, %1, %cst {dimension_numbers = #tpu.dot_dimension_numbers<[1], [0], [0], [1], [0, 0, 1, 1], [], []>} : vector<16x48xbf16>, vector<48x512xbf16>, vector<16x512xf32> -> vector<16x512xf32>
    %c0_3 = arith.constant 0 : index
    %c0_4 = arith.constant 0 : index
    %3 = vector.load %arg3[%c0_3, %c0_4] : memref<1x512xf32, #tpu.memory_space<vmem>>, vector<1x512xf32>
    %4 = vector.broadcast %3 : vector<1x512xf32> to vector<16x512xf32>
    %5 = arith.addf %2, %4 : vector<16x512xf32>
    %cst_5 = arith.constant 0.000000e+00 : f32
    %6 = vector.broadcast %cst_5 : f32 to vector<16x512xf32>
    %7 = arith.maximumf %5, %6 : vector<16x512xf32>
    %8 = arith.truncf %7 : vector<16x512xf32> to vector<16x512xbf16>
    %c0_6 = arith.constant 0 : index
    %c0_7 = arith.constant 0 : index
    %9 = vector.load %arg4[%c0_6, %c0_7] : memref<512x1024xbf16, #tpu.memory_space<vmem>>, vector<512x1024xbf16>
    %cst_8 = arith.constant dense<0.000000e+00> : vector<16x1024xf32>
    %10 = tpu.matmul %8, %9, %cst_8 {dimension_numbers = #tpu.dot_dimension_numbers<[1], [0], [0], [1], [0, 0, 1, 1], [], []>} : vector<16x512xbf16>, vector<512x1024xbf16>, vector<16x1024xf32> -> vector<16x1024xf32>
    %c0_9 = arith.constant 0 : index
    %c0_10 = arith.constant 0 : index
    %11 = vector.load %arg5[%c0_9, %c0_10] : memref<1x1024xf32, #tpu.memory_space<vmem>>, vector<1x1024xf32>
    %12 = vector.broadcast %11 : vector<1x1024xf32> to vector<16x1024xf32>
    %13 = arith.addf %10, %12 : vector<16x1024xf32>
    %cst_11 = arith.constant 0.000000e+00 : f32
    %14 = vector.broadcast %cst_11 : f32 to vector<16x1024xf32>
    %15 = arith.maximumf %13, %14 : vector<16x1024xf32>
    %16 = arith.truncf %15 : vector<16x1024xf32> to vector<16x1024xbf16>
    %c0_12 = arith.constant 0 : index
    %c0_13 = arith.constant 0 : index
    %17 = vector.load %arg6[%c0_12, %c0_13] : memref<1024x128xbf16, #tpu.memory_space<vmem>>, vector<1024x128xbf16>
    %cst_14 = arith.constant dense<0.000000e+00> : vector<16x128xf32>
    %18 = tpu.matmul %16, %17, %cst_14 {dimension_numbers = #tpu.dot_dimension_numbers<[1], [0], [0], [1], [0, 0, 1, 1], [], []>} : vector<16x1024xbf16>, vector<1024x128xbf16>, vector<16x128xf32> -> vector<16x128xf32>
    %c0_15 = arith.constant 0 : index
    %c0_16 = arith.constant 0 : index
    %19 = vector.load %arg7[%c0_15, %c0_16] : memref<1x128xf32, #tpu.memory_space<vmem>>, vector<1x128xf32>
    %20 = vector.broadcast %19 : vector<1x128xf32> to vector<16x128xf32>
    %21 = arith.addf %18, %20 : vector<16x128xf32>
    %c0_17 = arith.constant 0 : index
    %c0_18 = arith.constant 0 : index
    %22 = vector.load %arg8[%c0_17, %c0_18] : memref<16x128xf32, #tpu.memory_space<vmem>>, vector<16x128xf32>
    tpu.vector_store %arg8[%c0_17, %c0_18], %21 {strides = array<i32>} : memref<16x128xf32, #tpu.memory_space<vmem>>, vector<16x128xf32>,
    return
  }
  func.func @transform_0(%arg0: i32) -> (i32, i32) {
    %c0_i32 = arith.constant 0 : i32
    %c0_i32_0 = arith.constant 0 : i32
    return %arg0, %c0_i32 : i32, i32
  }
  func.func @transform_1(%arg0: i32) -> (i32, i32) {
    %c0_i32 = arith.constant 0 : i32
    %c0_i32_0 = arith.constant 0 : i32
    %c0_i32_1 = arith.constant 0 : i32
    return %c0_i32, %c0_i32_0 : i32, i32
  }
  func.func @transform_2(%arg0: i32) -> (i32, i32) {
    %c0_i32 = arith.constant 0 : i32
    %c0_i32_0 = arith.constant 0 : i32
    %c0_i32_1 = arith.constant 0 : i32
    return %c0_i32, %c0_i32_0 : i32, i32
  }
  func.func @transform_3(%arg0: i32) -> (i32, i32) {
    %c0_i32 = arith.constant 0 : i32
    %c0_i32_0 = arith.constant 0 : i32
    %c0_i32_1 = arith.constant 0 : i32
    return %c0_i32, %c0_i32_0 : i32, i32
  }
  func.func @transform_4(%arg0: i32) -> (i32, i32) {
    %c0_i32 = arith.constant 0 : i32
    %c0_i32_0 = arith.constant 0 : i32
    %c0_i32_1 = arith.constant 0 : i32
    return %c0_i32, %c0_i32_0 : i32, i32
  }
  func.func @transform_5(%arg0: i32) -> (i32, i32) {
    %c0_i32 = arith.constant 0 : i32
    %c0_i32_0 = arith.constant 0 : i32
    %c0_i32_1 = arith.constant 0 : i32
    return %c0_i32, %c0_i32_0 : i32, i32
  }
  func.func @transform_6(%arg0: i32) -> (i32, i32) {
    %c0_i32 = arith.constant 0 : i32
    %c0_i32_0 = arith.constant 0 : i32
    %c0_i32_1 = arith.constant 0 : i32
    return %c0_i32, %c0_i32_0 : i32, i32
  }
  func.func @transform_7(%arg0: i32) -> (i32, i32) {
    %c0_i32 = arith.constant 0 : i32
    %c0_i32_0 = arith.constant 0 : i32
    return %arg0, %c0_i32 : i32, i32
  }
}

</mosaic_0001>

<llo_original>
// kernel: tpu_custom_call.1
$region0: #{tpu_custom_call.1}
  #allocation0 [shape = 'u32[]', space=smem, size = 0x4, offset = 0x4, fixed_abs, tag = 'smem constant byte address 0x4 - core index']
  #allocation1 [shape = 'u32[72,128]{1,0:T(1,128)}', space=vmem, size = 0x9000, scoped, tag = 'internal scratch']
  %s0 = inlined_call_operand.hbm [shape: bf16[16,48], index: 0, kind: input, shape index: {}]
  %s1 = inlined_call_operand.hbm [shape: bf16[48,512], index: 1, kind: input, shape index: {}]
  %s2 = inlined_call_operand.hbm [shape: f32[1,512], index: 2, kind: input, shape index: {}]
  %s3 = inlined_call_operand.hbm [shape: bf16[512,1024], index: 3, kind: input, shape index: {}]
  %s4 = inlined_call_operand.hbm [shape: f32[1,1024], index: 4, kind: input, shape index: {}]
  %s5 = inlined_call_operand.hbm [shape: bf16[1024,128], index: 5, kind: input, shape index: {}]
  %s6 = inlined_call_operand.vmem [shape: f32[1,128], index: 6, kind: input, shape index: {}]
  %s7 = inlined_call_operand.hbm [shape: f32[16,128], index: 7, kind: output, shape index: {}]
  %s8 = sld [smem:[#allocation0]]
  $region62: #{tpu_custom_call.1} parent=0
    _
  %s10 = ssub.s32 1, %s8
  %s11 = scalar_select 0, %s10, %s8
  $region1: #{tpu_custom_call.1} parent=0
    #allocation2 [shape = 'u8[4096]{0}', space=vmem, size = 0x1000, scoped, tag = 'input window, operand 0, single buffered']
    #allocation3 [shape = 's32[1]{0}', space=sflag, size = 0x4, scoped, tag = 'scoped memory for tpu_custom_call.1']
    #allocation4 [shape = 's32[1]{0}', space=sflag, size = 0x4, scoped, tag = 'scoped memory for tpu_custom_call.1']
    #allocation5 [shape = 'u8[49152]{0}', space=vmem, size = 0xc000, scoped, tag = 'input window, operand 1, single buffered']
    #allocation6 [shape = 's32[1]{0}', space=sflag, size = 0x4, scoped, tag = 'scoped memory for tpu_custom_call.1']
    #allocation7 [shape = 'u8[2048]{0}', space=vmem, size = 0x800, scoped, tag = 'input window, operand 2, single buffered']
    #allocation8 [shape = 'u8[1048576]{0}', space=vmem, size = 0x100000, scoped, tag = 'input window, operand 3, single buffered']
    #allocation9 [shape = 's32[1]{0}', space=sflag, size = 0x4, scoped, tag = 'scoped memory for tpu_custom_call.1']
    #allocation10 [shape = 'u8[4096]{0}', space=vmem, size = 0x1000, scoped, tag = 'input window, operand 4, single buffered']
    #allocation11 [shape = 'u8[262144]{0}', space=vmem, size = 0x40000, scoped, tag = 'input window, operand 5, single buffered']
    #allocation12 [shape = 's32[1]{0}', space=sflag, size = 0x4, scoped, tag = 'scoped memory for tpu_custom_call.1']
    #allocation13 [shape = 'u8[8192]{0}', space=vmem, size = 0x2000, scoped, tag = 'output window, operand 0, single buffered']
    %12 = vsyncpa [#allocation3], 0
    %13 = vsyncpa [#allocation6], 0
    %14 = vsyncpa [#allocation9], 0
    %15 = vsyncpa [#allocation12], 0
    %16 = vsyncpa [#allocation4], 0
    // Predicated region
    $region2: #{tpu_custom_call.1} parent=1 // pred_check
      _
    $region3: #{tpu_custom_call.1} parent=1 // pred_check_branch
      %18 = sbr.rel (0) target = $region5
    $region4: #{tpu_custom_call.1} parent=1 // pred_region
      %20 = vsyncadd [#allocation3], 0
      %s21 = sshll.u32 %s0, 4
      %s22 = int_to_ptr.hbm [resolvable:$true] %s21
      %s23 = sshll.u32 [#allocation2], 4
      %s24 = int_to_ptr.vmem [resolvable:$true] %s23
      %29 = dma.hbm_to_vmem [thread:$0]  %s22, 128, %s24, [#allocation3], 64, 64, 4
    $region5: #{tpu_custom_call.1} parent=1 // pred_fallthru
      _
    // Predicated region
    $region6: #{tpu_custom_call.1} parent=1 // pred_check
      _
    $region7: #{tpu_custom_call.1} parent=1 // pred_check_branch
      %31 = sbr.rel (0) target = $region9
    $region8: #{tpu_custom_call.1} parent=1 // pred_region
      %33 = vsyncadd [#allocation6], 0
      %s34 = sshll.u32 %s1, 4
      %s35 = int_to_ptr.hbm [resolvable:$true] %s34
      %s36 = sshll.u32 [#allocation5], 4
      %s37 = int_to_ptr.vmem [resolvable:$true] %s36
      %42 = dma.hbm_to_vmem [thread:$0]  %s35, 1536, %s37, [#allocation6], 256, 256, 16
    $region9: #{tpu_custom_call.1} parent=1 // pred_fallthru
      _
    // Predicated region
    $region10: #{tpu_custom_call.1} parent=1 // pred_check
      _
    $region11: #{tpu_custom_call.1} parent=1 // pred_check_branch
      %44 = sbr.rel (0) target = $region13
    $region12: #{tpu_custom_call.1} parent=1 // pred_region
      %46 = vsyncadd [#allocation6], 0
      %s48 = sshll.u32 %s2, 4
      %s49 = int_to_ptr.hbm [resolvable:$true] %s48
      %s50 = sshll.u32 [#allocation7], 4
      %s51 = int_to_ptr.vmem [resolvable:$true] %s50
      %53 = dma.hbm_to_vmem [thread:$0]  %s49, 64, %s51, [#allocation6]
    $region13: #{tpu_custom_call.1} parent=1 // pred_fallthru
      _
    // Predicated region
    $region14: #{tpu_custom_call.1} parent=1 // pred_check
      _
    $region15: #{tpu_custom_call.1} parent=1 // pred_check_branch
      %55 = sbr.rel (0) target = $region17
    $region16: #{tpu_custom_call.1} parent=1 // pred_region
      %57 = vsyncadd [#allocation9], 0
      %s58 = sshll.u32 %s3, 4
      %s59 = int_to_ptr.hbm [resolvable:$true] %s58
      %s60 = sshll.u32 [#allocation8], 4
      %s61 = int_to_ptr.vmem [resolvable:$true] %s60
      %66 = dma.hbm_to_vmem [thread:$0]  %s59, 32768, %s61, [#allocation9], 512, 512, 32
    $region17: #{tpu_custom_call.1} parent=1 // pred_fallthru
      _
    // Predicated region
    $region18: #{tpu_custom_call.1} parent=1 // pred_check
      _
    $region19: #{tpu_custom_call.1} parent=1 // pred_check_branch
      %68 = sbr.rel (0) target = $region21
    $region20: #{tpu_custom_call.1} parent=1 // pred_region
      %70 = vsyncadd [#allocation9], 0
      %s72 = sshll.u32 %s4, 4
      %s73 = int_to_ptr.hbm [resolvable:$true] %s72
      %s74 = sshll.u32 [#allocation10], 4
      %s75 = int_to_ptr.vmem [resolvable:$true] %s74
      %77 = dma.hbm_to_vmem [thread:$0]  %s73, 128, %s75, [#allocation9]
    $region21: #{tpu_custom_call.1} parent=1 // pred_fallthru
      _
    // Predicated region
    $region22: #{tpu_custom_call.1} parent=1 // pred_check
      _
    $region23: #{tpu_custom_call.1} parent=1 // pred_check_branch
      %79 = sbr.rel (0) target = $region25
    $region24: #{tpu_custom_call.1} parent=1 // pred_region
      %81 = vsyncadd [#allocation12], 0
      %s82 = sshll.u32 %s5, 4
      %s83 = int_to_ptr.hbm [resolvable:$true] %s82
      %s84 = sshll.u32 [#allocation11], 4
      %s85 = int_to_ptr.vmem [resolvable:$true] %s84
      %90 = dma.hbm_to_vmem [thread:$0]  %s83, 8192, %s85, [#allocation12], 64, 64, 4
    $region25: #{tpu_custom_call.1} parent=1 // pred_fallthru
      _
    // Predicated region
    $region26: #{tpu_custom_call.1} parent=1 // pred_check
      _
    $region27: #{tpu_custom_call.1} parent=1 // pred_check_branch
      %92 = sbr.rel (0) target = $region29
    $region28: #{tpu_custom_call.1} parent=1 // pred_region
      _
    $region29: #{tpu_custom_call.1} parent=1 // pred_fallthru
      _
    // Predicated region
    $region30: #{tpu_custom_call.1} parent=1 // pred_check
      _
    $region31: #{tpu_custom_call.1} parent=1 // pred_check_branch
      %94 = sbr.rel (0) target = $region33
    $region32: #{tpu_custom_call.1} parent=1 // pred_region
      %96 = dma.done [#allocation3], 128
    $region33: #{tpu_custom_call.1} parent=1 // pred_fallthru
      _
    // Predicated region
    $region34: #{tpu_custom_call.1} parent=1 // pred_check
      _
    $region35: #{tpu_custom_call.1} parent=1 // pred_check_branch
      %98 = sbr.rel (0) target = $region37
    $region36: #{tpu_custom_call.1} parent=1 // pred_region
      %100 = dma.done [#allocation6], 1536
    $region37: #{tpu_custom_call.1} parent=1 // pred_fallthru
      _
    // Predicated region
    $region38: #{tpu_custom_call.1} parent=1 // pred_check
      _
    $region39: #{tpu_custom_call.1} parent=1 // pred_check_branch
      %102 = sbr.rel (0) target = $region41
    $region40: #{tpu_custom_call.1} parent=1 // pred_region
      %104 = dma.done [#allocation6], 64
    $region41: #{tpu_custom_call.1} parent=1 // pred_fallthru
      _
    // Predicated region
    $region42: #{tpu_custom_call.1} parent=1 // pred_check
      _
    $region43: #{tpu_custom_call.1} parent=1 // pred_check_branch
      %106 = sbr.rel (0) target = $region45
    $region44: #{tpu_custom_call.1} parent=1 // pred_region
      %108 = dma.done [#allocation9], 32768
    $region45: #{tpu_custom_call.1} parent=1 // pred_fallthru
      _
    // Predicated region
    $region46: #{tpu_custom_call.1} parent=1 // pred_check
      _
    $region47: #{tpu_custom_call.1} parent=1 // pred_check_branch
      %110 = sbr.rel (0) target = $region49
    $region48: #{tpu_custom_call.1} parent=1 // pred_region
      %112 = dma.done [#allocation9], 128
    $region49: #{tpu_custom_call.1} parent=1 // pred_fallthru
      _
    // Predicated region
    $region50: #{tpu_custom_call.1} parent=1 // pred_check
      _
    $region51: #{tpu_custom_call.1} parent=1 // pred_check_branch
      %114 = sbr.rel (0) target = $region53
    $region52: #{tpu_custom_call.1} parent=1 // pred_region
      %116 = dma.done [#allocation12], 8192
    $region53: #{tpu_custom_call.1} parent=1 // pred_fallthru
      _
    %v118 = vld [vmem:[#allocation2] sm:$0xf]
    %v119 = vld [vmem:[#allocation2 + $0x4] sm:$0xf]
    %v120 = vld [vmem:[#allocation5] sm:$0xff]
    %v121 = vld [vmem:[#allocation5 + $0x8] sm:$0xff]
    %v122 = vld [vmem:[#allocation5 + $0x10] sm:$0xff]
    %v123 = vld [vmem:[#allocation5 + $0x18] sm:$0xff]
    %v124 = vld [vmem:[#allocation5 + $0x20] sm:$0xff]
    %v125 = vld [vmem:[#allocation5 + $0x28] sm:$0xff]
    %v126 = vld [vmem:[#allocation5 + $0x30] sm:$0xff]
    %v127 = vld [vmem:[#allocation5 + $0x38] sm:$0xff]
    %v128 = vld [vmem:[#allocation5 + $0x40] sm:$0xff]
    %v129 = vld [vmem:[#allocation5 + $0x48] sm:$0xff]
    %v130 = vld [vmem:[#allocation5 + $0x50] sm:$0xff]
    %v131 = vld [vmem:[#allocation5 + $0x58] sm:$0xff]
    %v132 = vld [vmem:[#allocation7] sm:$0xf]
    %v134 = vperm.slane %v132, 0
    %v135 = vperm.slane %v132, 1
    %v136 = vperm.slane %v132, 2
    %v137 = vperm.slane %v132, 3
    %v144 = vunpack.c.l.b16 %v118
    %v145 = vunpack.c.l.b16 %v119
    %v146 = vpack.c.b16 %v145, %v144
    %v159 = vunpack.c.l.b16 %v120
    %v160 = vunpack.c.h.b16 %v120
    %v161 = vunpack.c.l.b16 %v121
    %v162 = vunpack.c.h.b16 %v121
    %v163 = vunpack.c.l.b16 %v122
    %v164 = vunpack.c.h.b16 %v122
    %v165 = vunpack.c.l.b16 %v123
    %v166 = vunpack.c.h.b16 %v123
    %v167 = vunpack.c.l.b16 %v124
    %v168 = vunpack.c.h.b16 %v124
    %v169 = vunpack.c.l.b16 %v125
    %v170 = vunpack.c.h.b16 %v125
    %v171 = vunpack.c.l.b16 %v126
    %v172 = vunpack.c.h.b16 %v126
    %v173 = vunpack.c.l.b16 %v127
    %v174 = vunpack.c.h.b16 %v127
    %v175 = vunpack.c.l.b16 %v128
    %v176 = vunpack.c.h.b16 %v128
    %v177 = vunpack.c.l.b16 %v129
    %v178 = vunpack.c.h.b16 %v129
    %v179 = vunpack.c.l.b16 %v130
    %v180 = vunpack.c.h.b16 %v130
    %v181 = vunpack.c.l.b16 %v131
    %v182 = vunpack.c.h.b16 %v131
    %v183 = vpack.c.b16 %v163, %v159
    %v184 = vpack.c.b16 %v164, %v160
    %v185 = vpack.c.b16 %v165, %v161
    %v186 = vpack.c.b16 %v166, %v162
    %v187 = vpack.c.b16 %v171, %v167
    %v188 = vpack.c.b16 %v172, %v168
    %v189 = vpack.c.b16 %v173, %v169
    %v190 = vpack.c.b16 %v174, %v170
    %v191 = vpack.c.b16 %v179, %v175
    %v192 = vpack.c.b16 %v180, %v176
    %v193 = vpack.c.b16 %v181, %v177
    %v194 = vpack.c.b16 %v182, %v178
    %vm207 = vcmask 392192
    %v209 = vsel %vm207, %v146, 0
    %211 = vmatpush.bf16.msra.mxu0 0
    %212 = vmatpush.bf16.msra.mxu0 0
    %213 = vmatpush.bf16.msra.mxu0 0
    %214 = vmatpush.bf16.msra.mxu0 0
    %215 = vmatpush.bf16.msra.mxu0 0
    %216 = vmatpush.bf16.msra.mxu0 %v191
    %217 = vmatpush.bf16.msra.mxu0 %v187
    %218 = vmatpush.bf16.msra.mxu0 %v183
    %219 = vmatmul.bf16.gmra.mxu0 %v209
    %v220 = vpop.f32.mrf.mxu0
    %v221 = vadd.f32 %v134, %v220
    %v222 = vpop.f32.mrf.mxu0
    %v223 = vadd.f32 %v134, %v222
    %224 = vdwg.mxu0
    %225 = vmatpush.bf16.msra.mxu0 0
    %226 = vmatpush.bf16.msra.mxu0 0
    %227 = vmatpush.bf16.msra.mxu0 0
    %228 = vmatpush.bf16.msra.mxu0 0
    %229 = vmatpush.bf16.msra.mxu0 0
    %230 = vmatpush.bf16.msra.mxu0 %v192
    %231 = vmatpush.bf16.msra.mxu0 %v188
    %232 = vmatpush.bf16.msra.mxu0 %v184
    %233 = vmatmul.bf16.gmra.mxu0 %v209
    %v234 = vpop.f32.mrf.mxu0
    %v235 = vadd.f32 %v135, %v234
    %v236 = vpop.f32.mrf.mxu0
    %v237 = vadd.f32 %v135, %v236
    %238 = vdwg.mxu0
    %239 = vmatpush.bf16.msra.mxu0 0
    %240 = vmatpush.bf16.msra.mxu0 0
    %241 = vmatpush.bf16.msra.mxu0 0
    %242 = vmatpush.bf16.msra.mxu0 0
    %243 = vmatpush.bf16.msra.mxu0 0
    %244 = vmatpush.bf16.msra.mxu0 %v193
    %245 = vmatpush.bf16.msra.mxu0 %v189
    %246 = vmatpush.bf16.msra.mxu0 %v185
    %247 = vmatmul.bf16.gmra.mxu0 %v209
    %v248 = vpop.f32.mrf.mxu0
    %v249 = vadd.f32 %v136, %v248
    %v250 = vpop.f32.mrf.mxu0
    %v251 = vadd.f32 %v136, %v250
    %252 = vdwg.mxu0
    %253 = vmatpush.bf16.msra.mxu0 0
    %254 = vmatpush.bf16.msra.mxu0 0
    %255 = vmatpush.bf16.msra.mxu0 0
    %256 = vmatpush.bf16.msra.mxu0 0
    %257 = vmatpush.bf16.msra.mxu0 0
    %258 = vmatpush.bf16.msra.mxu0 %v194
    %259 = vmatpush.bf16.msra.mxu0 %v190
    %260 = vmatpush.bf16.msra.mxu0 %v186
    %261 = vmatmul.bf16.gmra.mxu0 %v209
    %v262 = vpop.f32.mrf.mxu0
    %v263 = vadd.f32 %v137, %v262
    %v264 = vpop.f32.mrf.mxu0
    %v265 = vadd.f32 %v137, %v264
    %266 = vdwg.mxu0
    %v267 = vmax.f32 %v221, 0.0
    %v268 = vmax.f32 %v235, 0.0
    %v269 = vmax.f32 %v249, 0.0
    %v270 = vmax.f32 %v263, 0.0
    %v271 = vmax.f32 %v223, 0.0
    %v272 = vmax.f32 %v237, 0.0
    %v273 = vmax.f32 %v251, 0.0
    %v274 = vmax.f32 %v265, 0.0
    %v275 = vpack.c.bf16 %v271, %v267
    %v276 = vpack.c.bf16 %v272, %v268
    %v277 = vpack.c.bf16 %v273, %v269
    %v278 = vpack.c.bf16 %v274, %v270
    %v279 = vld [vmem:[#allocation8] sm:$0xff]
    %v280 = vld [vmem:[#allocation8 + $0x8] sm:$0xff]
    %v281 = vld [vmem:[#allocation8 + $0x10] sm:$0xff]
    %v282 = vld [vmem:[#allocation8 + $0x18] sm:$0xff]
    %v283 = vld [vmem:[#allocation8 + $0x20] sm:$0xff]
    %v284 = vld [vmem:[#allocation8 + $0x28] sm:$0xff]
    %v285 = vld [vmem:[#allocation8 + $0x30] sm:$0xff]
    %v286 = vld [vmem:[#allocation8 + $0x38] sm:$0xff]
    %v287 = vld [vmem:[#allocation8 + $0x40] sm:$0xff]
    %v288 = vld [vmem:[#allocation8 + $0x48] sm:$0xff]
    %v289 = vld [vmem:[#allocation8 + $0x50] sm:$0xff]
    %v290 = vld [vmem:[#allocation8 + $0x58] sm:$0xff]
    %v291 = vld [vmem:[#allocation8 + $0x60] sm:$0xff]
    %v292 = vld [vmem:[#allocation8 + $0x68] sm:$0xff]
    %v293 = vld [vmem:[#allocation8 + $0x70] sm:$0xff]
    %v294 = vld [vmem:[#allocation8 + $0x78] sm:$0xff]
    %v295 = vld [vmem:[#allocation8 + $0x80] sm:$0xff]
    %v296 = vld [vmem:[#allocation8 + $0x88] sm:$0xff]
    %v297 = vld [vmem:[#allocation8 + $0x90] sm:$0xff]
    %v298 = vld [vmem:[#allocation8 + $0x98] sm:$0xff]
    %v299 = vld [vmem:[#allocation8 + $0xa0] sm:$0xff]
    %v300 = vld [vmem:[#allocation8 + $0xa8] sm:$0xff]
    %v301 = vld [vmem:[#allocation8 + $0xb0] sm:$0xff]
    %v302 = vld [vmem:[#allocation8 + $0xb8] sm:$0xff]
    %v303 = vld [vmem:[#allocation8 + $0xc0] sm:$0xff]
    %v304 = vld [vmem:[#allocation8 + $0xc8] sm:$0xff]
    %v305 = vld [vmem:[#allocation8 + $0xd0] sm:$0xff]
    %v306 = vld [vmem:[#allocation8 + $0xd8] sm:$0xff]
    %v307 = vld [vmem:[#allocation8 + $0xe0] sm:$0xff]
    %v308 = vld [vmem:[#allocation8 + $0xe8] sm:$0xff]
    %v309 = vld [vmem:[#allocation8 + $0xf0] sm:$0xff]
    %v310 = vld [vmem:[#allocation8 + $0xf8] sm:$0xff]
    %v311 = vld [vmem:[#allocation8 + $0x100] sm:$0xff]
    %v312 = vld [vmem:[#allocation8 + $0x108] sm:$0xff]
    %v313 = vld [vmem:[#allocation8 + $0x110] sm:$0xff]
    %v314 = vld [vmem:[#allocation8 + $0x118] sm:$0xff]
    %v315 = vld [vmem:[#allocation8 + $0x120] sm:$0xff]
    %v316 = vld [vmem:[#allocation8 + $0x128] sm:$0xff]
    %v317 = vld [vmem:[#allocation8 + $0x130] sm:$0xff]
    %v318 = vld [vmem:[#allocation8 + $0x138] sm:$0xff]
    %v319 = vld [vmem:[#allocation8 + $0x140] sm:$0xff]
    %v320 = vld [vmem:[#allocation8 + $0x148] sm:$0xff]
    %v321 = vld [vmem:[#allocation8 + $0x150] sm:$0xff]
    %v322 = vld [vmem:[#allocation8 + $0x158] sm:$0xff]
    %v323 = vld [vmem:[#allocation8 + $0x160] sm:$0xff]
    %v324 = vld [vmem:[#allocation8 + $0x168] sm:$0xff]
    %v325 = vld [vmem:[#allocation8 + $0x170] sm:$0xff]
    %v326 = vld [vmem:[#allocation8 + $0x178] sm:$0xff]
    %v327 = vld [vmem:[#allocation8 + $0x180] sm:$0xff]
    %v328 = vld [vmem:[#allocation8 + $0x188] sm:$0xff]
    %v329 = vld [vmem:[#allocation8 + $0x190] sm:$0xff]
    %v330 = vld [vmem:[#allocation8 + $0x198] sm:$0xff]
    %v331 = vld [vmem:[#allocation8 + $0x1a0] sm:$0xff]
    %v332 = vld [vmem:[#allocation8 + $0x1a8] sm:$0xff]
    %v333 = vld [vmem:[#allocation8 + $0x1b0] sm:$0xff]
    %v334 = vld [vmem:[#allocation8 + $0x1b8] sm:$0xff]
    %v335 = vld [vmem:[#allocation8 + $0x1c0] sm:$0xff]
    %v336 = vld [vmem:[#allocation8 + $0x1c8] sm:$0xff]
    %v337 = vld [vmem:[#allocation8 + $0x1d0] sm:$0xff]
    %v338 = vld [vmem:[#allocation8 + $0x1d8] sm:$0xff]
    %v339 = vld [vmem:[#allocation8 + $0x1e0] sm:$0xff]
    %v340 = vld [vmem:[#allocation8 + $0x1e8] sm:$0xff]
    %v341 = vld [vmem:[#allocation8 + $0x1f0] sm:$0xff]
    %v342 = vld [vmem:[#allocation8 + $0x1f8] sm:$0xff]
    %v343 = vld [vmem:[#allocation8 + $0x200] sm:$0xff]
    %v344 = vld [vmem:[#allocation8 + $0x208] sm:$0xff]
    %v345 = vld [vmem:[#allocation8 + $0x210] sm:$0xff]
    %v346 = vld [vmem:[#allocation8 + $0x218] sm:$0xff]
    %v347 = vld [vmem:[#allocation8 + $0x220] sm:$0xff]
    %v348 = vld [vmem:[#allocation8 + $0x228] sm:$0xff]
    %v349 = vld [vmem:[#allocation8 + $0x230] sm:$0xff]
    %v350 = vld [vmem:[#allocation8 + $0x238] sm:$0xff]
    %v351 = vld [vmem:[#allocation8 + $0x240] sm:$0xff]
    %v352 = vld [vmem:[#allocation8 + $0x248] sm:$0xff]
    %v353 = vld [vmem:[#allocation8 + $0x250] sm:$0xff]
    %v354 = vld [vmem:[#allocation8 + $0x258] sm:$0xff]
    %v355 = vld [vmem:[#allocation8 + $0x260] sm:$0xff]
    %v356 = vld [vmem:[#allocation8 + $0x268] sm:$0xff]
    %v357 = vld [vmem:[#allocation8 + $0x270] sm:$0xff]
    %v358 = vld [vmem:[#allocation8 + $0x278] sm:$0xff]
    %v359 = vld [vmem:[#allocation8 + $0x280] sm:$0xff]
    %v360 = vld [vmem:[#allocation8 + $0x288] sm:$0xff]
    %v361 = vld [vmem:[#allocation8 + $0x290] sm:$0xff]
    %v362 = vld [vmem:[#allocation8 + $0x298] sm:$0xff]
    %v363 = vld [vmem:[#allocation8 + $0x2a0] sm:$0xff]
    %v364 = vld [vmem:[#allocation8 + $0x2a8] sm:$0xff]
    %v365 = vld [vmem:[#allocation8 + $0x2b0] sm:$0xff]
    %v366 = vld [vmem:[#allocation8 + $0x2b8] sm:$0xff]
    %v367 = vld [vmem:[#allocation8 + $0x2c0] sm:$0xff]
    %v368 = vld [vmem:[#allocation8 + $0x2c8] sm:$0xff]
    %v369 = vld [vmem:[#allocation8 + $0x2d0] sm:$0xff]
    %v370 = vld [vmem:[#allocation8 + $0x2d8] sm:$0xff]
    %v371 = vld [vmem:[#allocation8 + $0x2e0] sm:$0xff]
    %v372 = vld [vmem:[#allocation8 + $0x2e8] sm:$0xff]
    %v373 = vld [vmem:[#allocation8 + $0x2f0] sm:$0xff]
    %v374 = vld [vmem:[#allocation8 + $0x2f8] sm:$0xff]
    %v375 = vld [vmem:[#allocation8 + $0x300] sm:$0xff]
    %v376 = vld [vmem:[#allocation8 + $0x308] sm:$0xff]
    %v377 = vld [vmem:[#allocation8 + $0x310] sm:$0xff]
    %v378 = vld [vmem:[#allocation8 + $0x318] sm:$0xff]
    %v379 = vld [vmem:[#allocation8 + $0x320] sm:$0xff]
    %v380 = vld [vmem:[#allocation8 + $0x328] sm:$0xff]
    %v381 = vld [vmem:[#allocation8 + $0x330] sm:$0xff]
    %v382 = vld [vmem:[#allocation8 + $0x338] sm:$0xff]
    %v383 = vld [vmem:[#allocation8 + $0x340] sm:$0xff]
    %v384 = vld [vmem:[#allocation8 + $0x348] sm:$0xff]
    %v385 = vld [vmem:[#allocation8 + $0x350] sm:$0xff]
    %v386 = vld [vmem:[#allocation8 + $0x358] sm:$0xff]
    %v387 = vld [vmem:[#allocation8 + $0x360] sm:$0xff]
    %v388 = vld [vmem:[#allocation8 + $0x368] sm:$0xff]
    %v389 = vld [vmem:[#allocation8 + $0x370] sm:$0xff]
    %v390 = vld [vmem:[#allocation8 + $0x378] sm:$0xff]
    %v391 = vld [vmem:[#allocation8 + $0x380] sm:$0xff]
    %v392 = vld [vmem:[#allocation8 + $0x388] sm:$0xff]
    %v393 = vld [vmem:[#allocation8 + $0x390] sm:$0xff]
    %v394 = vld [vmem:[#allocation8 + $0x398] sm:$0xff]
    %v395 = vld [vmem:[#allocation8 + $0x3a0] sm:$0xff]
    %v396 = vld [vmem:[#allocation8 + $0x3a8] sm:$0xff]
    %v397 = vld [vmem:[#allocation8 + $0x3b0] sm:$0xff]
    %v398 = vld [vmem:[#allocation8 + $0x3b8] sm:$0xff]
    %v399 = vld [vmem:[#allocation8 + $0x3c0] sm:$0xff]
    %v400 = vld [vmem:[#allocation8 + $0x3c8] sm:$0xff]
    %v401 = vld [vmem:[#allocation8 + $0x3d0] sm:$0xff]
    %v402 = vld [vmem:[#allocation8 + $0x3d8] sm:$0xff]
    %v403 = vld [vmem:[#allocation8 + $0x3e0] sm:$0xff]
    %v404 = vld [vmem:[#allocation8 + $0x3e8] sm:$0xff]
    %v405 = vld [vmem:[#allocation8 + $0x3f0] sm:$0xff]
    %v406 = vld [vmem:[#allocation8 + $0x3f8] sm:$0xff]
    %v407 = vld [vmem:[#allocation8 + $0x400] sm:$0xff]
    %v408 = vld [vmem:[#allocation8 + $0x408] sm:$0xff]
    %v409 = vld [vmem:[#allocation8 + $0x410] sm:$0xff]
    %v410 = vld [vmem:[#allocation8 + $0x418] sm:$0xff]
    %v411 = vld [vmem:[#allocation8 + $0x420] sm:$0xff]
    %v412 = vld [vmem:[#allocation8 + $0x428] sm:$0xff]
    %v413 = vld [vmem:[#allocation8 + $0x430] sm:$0xff]
    %v414 = vld [vmem:[#allocation8 + $0x438] sm:$0xff]
    %v415 = vld [vmem:[#allocation8 + $0x440] sm:$0xff]
    %v416 = vld [vmem:[#allocation8 + $0x448] sm:$0xff]
    %v417 = vld [vmem:[#allocation8 + $0x450] sm:$0xff]
    %v418 = vld [vmem:[#allocation8 + $0x458] sm:$0xff]
    %v419 = vld [vmem:[#allocation8 + $0x460] sm:$0xff]
    %v420 = vld [vmem:[#allocation8 + $0x468] sm:$0xff]
    %v421 = vld [vmem:[#allocation8 + $0x470] sm:$0xff]
    %v422 = vld [vmem:[#allocation8 + $0x478] sm:$0xff]
    %v423 = vld [vmem:[#allocation8 + $0x480] sm:$0xff]
    %v424 = vld [vmem:[#allocation8 + $0x488] sm:$0xff]
    %v425 = vld [vmem:[#allocation8 + $0x490] sm:$0xff]
    %v426 = vld [vmem:[#allocation8 + $0x498] sm:$0xff]
    %v427 = vld [vmem:[#allocation8 + $0x4a0] sm:$0xff]
    %v428 = vld [vmem:[#allocation8 + $0x4a8] sm:$0xff]
    %v429 = vld [vmem:[#allocation8 + $0x4b0] sm:$0xff]
    %v430 = vld [vmem:[#allocation8 + $0x4b8] sm:$0xff]
    %v431 = vld [vmem:[#allocation8 + $0x4c0] sm:$0xff]
    %v432 = vld [vmem:[#allocation8 + $0x4c8] sm:$0xff]
    %v433 = vld [vmem:[#allocation8 + $0x4d0] sm:$0xff]
    %v434 = vld [vmem:[#allocation8 + $0x4d8] sm:$0xff]
    %v435 = vld [vmem:[#allocation8 + $0x4e0] sm:$0xff]
    %v436 = vld [vmem:[#allocation8 + $0x4e8] sm:$0xff]
    %v437 = vld [vmem:[#allocation8 + $0x4f0] sm:$0xff]
    %v438 = vld [vmem:[#allocation8 + $0x4f8] sm:$0xff]
    %v439 = vld [vmem:[#allocation8 + $0x500] sm:$0xff]
    %v440 = vld [vmem:[#allocation8 + $0x508] sm:$0xff]
    %v441 = vld [vmem:[#allocation8 + $0x510] sm:$0xff]
    %v442 = vld [vmem:[#allocation8 + $0x518] sm:$0xff]
    %v443 = vld [vmem:[#allocation8 + $0x520] sm:$0xff]
    %v444 = vld [vmem:[#allocation8 + $0x528] sm:$0xff]
    %v445 = vld [vmem:[#allocation8 + $0x530] sm:$0xff]
    %v446 = vld [vmem:[#allocation8 + $0x538] sm:$0xff]
    %v447 = vld [vmem:[#allocation8 + $0x540] sm:$0xff]
    %v448 = vld [vmem:[#allocation8 + $0x548] sm:$0xff]
    %v449 = vld [vmem:[#allocation8 + $0x550] sm:$0xff]
    %v450 = vld [vmem:[#allocation8 + $0x558] sm:$0xff]
    %v451 = vld [vmem:[#allocation8 + $0x560] sm:$0xff]
    %v452 = vld [vmem:[#allocation8 + $0x568] sm:$0xff]
    %v453 = vld [vmem:[#allocation8 + $0x570] sm:$0xff]
    %v454 = vld [vmem:[#allocation8 + $0x578] sm:$0xff]
    %v455 = vld [vmem:[#allocation8 + $0x580] sm:$0xff]
    %v456 = vld [vmem:[#allocation8 + $0x588] sm:$0xff]
    %v457 = vld [vmem:[#allocation8 + $0x590] sm:$0xff]
    %v458 = vld [vmem:[#allocation8 + $0x598] sm:$0xff]
    %v459 = vld [vmem:[#allocation8 + $0x5a0] sm:$0xff]
    %v460 = vld [vmem:[#allocation8 + $0x5a8] sm:$0xff]
    %v461 = vld [vmem:[#allocation8 + $0x5b0] sm:$0xff]
    %v462 = vld [vmem:[#allocation8 + $0x5b8] sm:$0xff]
    %v463 = vld [vmem:[#allocation8 + $0x5c0] sm:$0xff]
    %v464 = vld [vmem:[#allocation8 + $0x5c8] sm:$0xff]
    %v465 = vld [vmem:[#allocation8 + $0x5d0] sm:$0xff]
    %v466 = vld [vmem:[#allocation8 + $0x5d8] sm:$0xff]
    %v467 = vld [vmem:[#allocation8 + $0x5e0] sm:$0xff]
    %v468 = vld [vmem:[#allocation8 + $0x5e8] sm:$0xff]
    %v469 = vld [vmem:[#allocation8 + $0x5f0] sm:$0xff]
    %v470 = vld [vmem:[#allocation8 + $0x5f8] sm:$0xff]
    %v471 = vld [vmem:[#allocation8 + $0x600] sm:$0xff]
    %v472 = vld [vmem:[#allocation8 + $0x608] sm:$0xff]
    %v473 = vld [vmem:[#allocation8 + $0x610] sm:$0xff]
    %v474 = vld [vmem:[#allocation8 + $0x618] sm:$0xff]
    %v475 = vld [vmem:[#allocation8 + $0x620] sm:$0xff]
    %v476 = vld [vmem:[#allocation8 + $0x628] sm:$0xff]
    %v477 = vld [vmem:[#allocation8 + $0x630] sm:$0xff]
    %v478 = vld [vmem:[#allocation8 + $0x638] sm:$0xff]
    %v479 = vld [vmem:[#allocation8 + $0x640] sm:$0xff]
    %v480 = vld [vmem:[#allocation8 + $0x648] sm:$0xff]
    %v481 = vld [vmem:[#allocation8 + $0x650] sm:$0xff]
    %v482 = vld [vmem:[#allocation8 + $0x658] sm:$0xff]
    %v483 = vld [vmem:[#allocation8 + $0x660] sm:$0xff]
    %v484 = vld [vmem:[#allocation8 + $0x668] sm:$0xff]
    %v485 = vld [vmem:[#allocation8 + $0x670] sm:$0xff]
    %v486 = vld [vmem:[#allocation8 + $0x678] sm:$0xff]
    %v487 = vld [vmem:[#allocation8 + $0x680] sm:$0xff]
    %v488 = vld [vmem:[#allocation8 + $0x688] sm:$0xff]
    %v489 = vld [vmem:[#allocation8 + $0x690] sm:$0xff]
    %v490 = vld [vmem:[#allocation8 + $0x698] sm:$0xff]
    %v491 = vld [vmem:[#allocation8 + $0x6a0] sm:$0xff]
    %v492 = vld [vmem:[#allocation8 + $0x6a8] sm:$0xff]
    %v493 = vld [vmem:[#allocation8 + $0x6b0] sm:$0xff]
    %v494 = vld [vmem:[#allocation8 + $0x6b8] sm:$0xff]
    %v495 = vld [vmem:[#allocation8 + $0x6c0] sm:$0xff]
    %v496 = vld [vmem:[#allocation8 + $0x6c8] sm:$0xff]
    %v497 = vld [vmem:[#allocation8 + $0x6d0] sm:$0xff]
    %v498 = vld [vmem:[#allocation8 + $0x6d8] sm:$0xff]
    %v499 = vld [vmem:[#allocation8 + $0x6e0] sm:$0xff]
    %v500 = vld [vmem:[#allocation8 + $0x6e8] sm:$0xff]
    %v501 = vld [vmem:[#allocation8 + $0x6f0] sm:$0xff]
    %v502 = vld [vmem:[#allocation8 + $0x6f8] sm:$0xff]
    %v503 = vld [vmem:[#allocation8 + $0x700] sm:$0xff]
    %v504 = vld [vmem:[#allocation8 + $0x708] sm:$0xff]
    %v505 = vld [vmem:[#allocation8 + $0x710] sm:$0xff]
    %v506 = vld [vmem:[#allocation8 + $0x718] sm:$0xff]
    %v507 = vld [vmem:[#allocation8 + $0x720] sm:$0xff]
    %v508 = vld [vmem:[#allocation8 + $0x728] sm:$0xff]
    %v509 = vld [vmem:[#allocation8 + $0x730] sm:$0xff]
    %v510 = vld [vmem:[#allocation8 + $0x738] sm:$0xff]
    %v511 = vld [vmem:[#allocation8 + $0x740] sm:$0xff]
    %v512 = vld [vmem:[#allocation8 + $0x748] sm:$0xff]
    %v513 = vld [vmem:[#allocation8 + $0x750] sm:$0xff]
    %v514 = vld [vmem:[#allocation8 + $0x758] sm:$0xff]
    %v515 = vld [vmem:[#allocation8 + $0x760] sm:$0xff]
    %v516 = vld [vmem:[#allocation8 + $0x768] sm:$0xff]
    %v517 = vld [vmem:[#allocation8 + $0x770] sm:$0xff]
    %v518 = vld [vmem:[#allocation8 + $0x778] sm:$0xff]
    %v519 = vld [vmem:[#allocation8 + $0x780] sm:$0xff]
    %v520 = vld [vmem:[#allocation8 + $0x788] sm:$0xff]
    %v521 = vld [vmem:[#allocation8 + $0x790] sm:$0xff]
    %v522 = vld [vmem:[#allocation8 + $0x798] sm:$0xff]
    %v523 = vld [vmem:[#allocation8 + $0x7a0] sm:$0xff]
    %v524 = vld [vmem:[#allocation8 + $0x7a8] sm:$0xff]
    %v525 = vld [vmem:[#allocation8 + $0x7b0] sm:$0xff]
    %v526 = vld [vmem:[#allocation8 + $0x7b8] sm:$0xff]
    %v527 = vld [vmem:[#allocation8 + $0x7c0] sm:$0xff]
    %v528 = vld [vmem:[#allocation8 + $0x7c8] sm:$0xff]
    %v529 = vld [vmem:[#allocation8 + $0x7d0] sm:$0xff]
    %v530 = vld [vmem:[#allocation8 + $0x7d8] sm:$0xff]
    %v531 = vld [vmem:[#allocation8 + $0x7e0] sm:$0xff]
    %v532 = vld [vmem:[#allocation8 + $0x7e8] sm:$0xff]
    %v533 = vld [vmem:[#allocation8 + $0x7f0] sm:$0xff]
    %v534 = vld [vmem:[#allocation8 + $0x7f8] sm:$0xff]
    %v535 = vld [vmem:[#allocation10] sm:$0xff]
    %v537 = vperm.slane %v535, 0
    %v538 = vperm.slane %v535, 1
    %v539 = vperm.slane %v535, 2
    %v540 = vperm.slane %v535, 3
    %v541 = vperm.slane %v535, 4
    %v542 = vperm.slane %v535, 5
    %v543 = vperm.slane %v535, 6
    %v544 = vperm.slane %v535, 7
    %v809 = vunpack.c.l.b16 %v279
    %v810 = vunpack.c.h.b16 %v279
    %v811 = vunpack.c.l.b16 %v280
    %v812 = vunpack.c.h.b16 %v280
    %v813 = vunpack.c.l.b16 %v281
    %v814 = vunpack.c.h.b16 %v281
    %v815 = vunpack.c.l.b16 %v282
    %v816 = vunpack.c.h.b16 %v282
    %v817 = vunpack.c.l.b16 %v283
    %v818 = vunpack.c.h.b16 %v283
    %v819 = vunpack.c.l.b16 %v284
    %v820 = vunpack.c.h.b16 %v284
    %v821 = vunpack.c.l.b16 %v285
    %v822 = vunpack.c.h.b16 %v285
    %v823 = vunpack.c.l.b16 %v286
    %v824 = vunpack.c.h.b16 %v286
    %v825 = vunpack.c.l.b16 %v287
    %v826 = vunpack.c.h.b16 %v287
    %v827 = vunpack.c.l.b16 %v288
    %v828 = vunpack.c.h.b16 %v288
    %v829 = vunpack.c.l.b16 %v289
    %v830 = vunpack.c.h.b16 %v289
    %v831 = vunpack.c.l.b16 %v290
    %v832 = vunpack.c.h.b16 %v290
    %v833 = vunpack.c.l.b16 %v291
    %v834 = vunpack.c.h.b16 %v291
    %v835 = vunpack.c.l.b16 %v292
    %v836 = vunpack.c.h.b16 %v292
    %v837 = vunpack.c.l.b16 %v293
    %v838 = vunpack.c.h.b16 %v293
    %v839 = vunpack.c.l.b16 %v294
    %v840 = vunpack.c.h.b16 %v294
    %v841 = vunpack.c.l.b16 %v295
    %v842 = vunpack.c.h.b16 %v295
    %v843 = vunpack.c.l.b16 %v296
    %v844 = vunpack.c.h.b16 %v296
    %v845 = vunpack.c.l.b16 %v297
    %v846 = vunpack.c.h.b16 %v297
    %v847 = vunpack.c.l.b16 %v298
    %v848 = vunpack.c.h.b16 %v298
    %v849 = vunpack.c.l.b16 %v299
    %v850 = vunpack.c.h.b16 %v299
    %v851 = vunpack.c.l.b16 %v300
    %v852 = vunpack.c.h.b16 %v300
    %v853 = vunpack.c.l.b16 %v301
    %v854 = vunpack.c.h.b16 %v301
    %v855 = vunpack.c.l.b16 %v302
    %v856 = vunpack.c.h.b16 %v302
    %v857 = vunpack.c.l.b16 %v303
    %v858 = vunpack.c.h.b16 %v303
    %v859 = vunpack.c.l.b16 %v304
    %v860 = vunpack.c.h.b16 %v304
    %v861 = vunpack.c.l.b16 %v305
    %v862 = vunpack.c.h.b16 %v305
    %v863 = vunpack.c.l.b16 %v306
    %v864 = vunpack.c.h.b16 %v306
    %v865 = vunpack.c.l.b16 %v307
    %v866 = vunpack.c.h.b16 %v307
    %v867 = vunpack.c.l.b16 %v308
    %v868 = vunpack.c.h.b16 %v308
    %v869 = vunpack.c.l.b16 %v309
    %v870 = vunpack.c.h.b16 %v309
    %v871 = vunpack.c.l.b16 %v310
    %v872 = vunpack.c.h.b16 %v310
    %v873 = vunpack.c.l.b16 %v311
    %v874 = vunpack.c.h.b16 %v311
    %v875 = vunpack.c.l.b16 %v312
    %v876 = vunpack.c.h.b16 %v312
    %v877 = vunpack.c.l.b16 %v313
    %v878 = vunpack.c.h.b16 %v313
    %v879 = vunpack.c.l.b16 %v314
    %v880 = vunpack.c.h.b16 %v314
    %v881 = vunpack.c.l.b16 %v315
    %v882 = vunpack.c.h.b16 %v315
    %v883 = vunpack.c.l.b16 %v316
    %v884 = vunpack.c.h.b16 %v316
    %v885 = vunpack.c.l.b16 %v317
    %v886 = vunpack.c.h.b16 %v317
    %v887 = vunpack.c.l.b16 %v318
    %v888 = vunpack.c.h.b16 %v318
    %v889 = vunpack.c.l.b16 %v319
    %v890 = vunpack.c.h.b16 %v319
    %v891 = vunpack.c.l.b16 %v320
    %v892 = vunpack.c.h.b16 %v320
    %v893 = vunpack.c.l.b16 %v321
    %v894 = vunpack.c.h.b16 %v321
    %v895 = vunpack.c.l.b16 %v322
    %v896 = vunpack.c.h.b16 %v322
    %v897 = vunpack.c.l.b16 %v323
    %v898 = vunpack.c.h.b16 %v323
    %v899 = vunpack.c.l.b16 %v324
    %v900 = vunpack.c.h.b16 %v324
    %v901 = vunpack.c.l.b16 %v325
    %v902 = vunpack.c.h.b16 %v325
    %v903 = vunpack.c.l.b16 %v326
    %v904 = vunpack.c.h.b16 %v326
    %v905 = vunpack.c.l.b16 %v327
    %v906 = vunpack.c.h.b16 %v327
    %v907 = vunpack.c.l.b16 %v328
    %v908 = vunpack.c.h.b16 %v328
    %v909 = vunpack.c.l.b16 %v329
    %v910 = vunpack.c.h.b16 %v329
    %v911 = vunpack.c.l.b16 %v330
    %v912 = vunpack.c.h.b16 %v330
    %v913 = vunpack.c.l.b16 %v331
    %v914 = vunpack.c.h.b16 %v331
    %v915 = vunpack.c.l.b16 %v332
    %v916 = vunpack.c.h.b16 %v332
    %v917 = vunpack.c.l.b16 %v333
    %v918 = vunpack.c.h.b16 %v333
    %v919 = vunpack.c.l.b16 %v334
    %v920 = vunpack.c.h.b16 %v334
    %v921 = vunpack.c.l.b16 %v335
    %v922 = vunpack.c.h.b16 %v335
    %v923 = vunpack.c.l.b16 %v336
    %v924 = vunpack.c.h.b16 %v336
    %v925 = vunpack.c.l.b16 %v337
    %v926 = vunpack.c.h.b16 %v337
    %v927 = vunpack.c.l.b16 %v338
    %v928 = vunpack.c.h.b16 %v338
    %v929 = vunpack.c.l.b16 %v339
    %v930 = vunpack.c.h.b16 %v339
    %v931 = vunpack.c.l.b16 %v340
    %v932 = vunpack.c.h.b16 %v340
    %v933 = vunpack.c.l.b16 %v341
    %v934 = vunpack.c.h.b16 %v341
    %v935 = vunpack.c.l.b16 %v342
    %v936 = vunpack.c.h.b16 %v342
    %v937 = vunpack.c.l.b16 %v343
    %v938 = vunpack.c.h.b16 %v343
    %v939 = vunpack.c.l.b16 %v344
    %v940 = vunpack.c.h.b16 %v344
    %v941 = vunpack.c.l.b16 %v345
    %v942 = vunpack.c.h.b16 %v345
    %v943 = vunpack.c.l.b16 %v346
    %v944 = vunpack.c.h.b16 %v346
    %v945 = vunpack.c.l.b16 %v347
    %v946 = vunpack.c.h.b16 %v347
    %v947 = vunpack.c.l.b16 %v348
    %v948 = vunpack.c.h.b16 %v348
    %v949 = vunpack.c.l.b16 %v349
    %v950 = vunpack.c.h.b16 %v349
    %v951 = vunpack.c.l.b16 %v350
    %v952 = vunpack.c.h.b16 %v350
    %v953 = vunpack.c.l.b16 %v351
    %v954 = vunpack.c.h.b16 %v351
    %v955 = vunpack.c.l.b16 %v352
    %v956 = vunpack.c.h.b16 %v352
    %v957 = vunpack.c.l.b16 %v353
    %v958 = vunpack.c.h.b16 %v353
    %v959 = vunpack.c.l.b16 %v354
    %v960 = vunpack.c.h.b16 %v354
    %v961 = vunpack.c.l.b16 %v355
    %v962 = vunpack.c.h.b16 %v355
    %v963 = vunpack.c.l.b16 %v356
    %v964 = vunpack.c.h.b16 %v356
    %v965 = vunpack.c.l.b16 %v357
    %v966 = vunpack.c.h.b16 %v357
    %v967 = vunpack.c.l.b16 %v358
    %v968 = vunpack.c.h.b16 %v358
    %v969 = vunpack.c.l.b16 %v359
    %v970 = vunpack.c.h.b16 %v359
    %v971 = vunpack.c.l.b16 %v360
    %v972 = vunpack.c.h.b16 %v360
    %v973 = vunpack.c.l.b16 %v361
    %v974 = vunpack.c.h.b16 %v361
    %v975 = vunpack.c.l.b16 %v362
    %v976 = vunpack.c.h.b16 %v362
    %v977 = vunpack.c.l.b16 %v363
    %v978 = vunpack.c.h.b16 %v363
    %v979 = vunpack.c.l.b16 %v364
    %v980 = vunpack.c.h.b16 %v364
    %v981 = vunpack.c.l.b16 %v365
    %v982 = vunpack.c.h.b16 %v365
    %v983 = vunpack.c.l.b16 %v366
    %v984 = vunpack.c.h.b16 %v366
    %v985 = vunpack.c.l.b16 %v367
    %v986 = vunpack.c.h.b16 %v367
    %v987 = vunpack.c.l.b16 %v368
    %v988 = vunpack.c.h.b16 %v368
    %v989 = vunpack.c.l.b16 %v369
    %v990 = vunpack.c.h.b16 %v369
    %v991 = vunpack.c.l.b16 %v370
    %v992 = vunpack.c.h.b16 %v370
    %v993 = vunpack.c.l.b16 %v371
    %v994 = vunpack.c.h.b16 %v371
    %v995 = vunpack.c.l.b16 %v372
    %v996 = vunpack.c.h.b16 %v372
    %v997 = vunpack.c.l.b16 %v373
    %v998 = vunpack.c.h.b16 %v373
    %v999 = vunpack.c.l.b16 %v374
    %v1000 = vunpack.c.h.b16 %v374
    %v1001 = vunpack.c.l.b16 %v375
    %v1002 = vunpack.c.h.b16 %v375
    %v1003 = vunpack.c.l.b16 %v376
    %v1004 = vunpack.c.h.b16 %v376
    %v1005 = vunpack.c.l.b16 %v377
    %v1006 = vunpack.c.h.b16 %v377
    %v1007 = vunpack.c.l.b16 %v378
    %v1008 = vunpack.c.h.b16 %v378
    %v1009 = vunpack.c.l.b16 %v379
    %v1010 = vunpack.c.h.b16 %v379
    %v1011 = vunpack.c.l.b16 %v380
    %v1012 = vunpack.c.h.b16 %v380
    %v1013 = vunpack.c.l.b16 %v381
    %v1014 = vunpack.c.h.b16 %v381
    %v1015 = vunpack.c.l.b16 %v382
    %v1016 = vunpack.c.h.b16 %v382
    %v1017 = vunpack.c.l.b16 %v383
    %v1018 = vunpack.c.h.b16 %v383
    %v1019 = vunpack.c.l.b16 %v384
    %v1020 = vunpack.c.h.b16 %v384
    %v1021 = vunpack.c.l.b16 %v385
    %v1022 = vunpack.c.h.b16 %v385
    %v1023 = vunpack.c.l.b16 %v386
    %v1024 = vunpack.c.h.b16 %v386
    %v1025 = vunpack.c.l.b16 %v387
    %v1026 = vunpack.c.h.b16 %v387
    %v1027 = vunpack.c.l.b16 %v388
    %v1028 = vunpack.c.h.b16 %v388
    %v1029 = vunpack.c.l.b16 %v389
    %v1030 = vunpack.c.h.b16 %v389
    %v1031 = vunpack.c.l.b16 %v390
    %v1032 = vunpack.c.h.b16 %v390
    %v1033 = vunpack.c.l.b16 %v391
    %v1034 = vunpack.c.h.b16 %v391
    %v1035 = vunpack.c.l.b16 %v392
    %v1036 = vunpack.c.h.b16 %v392
    %v1037 = vunpack.c.l.b16 %v393
    %v1038 = vunpack.c.h.b16 %v393
    %v1039 = vunpack.c.l.b16 %v394
    %v1040 = vunpack.c.h.b16 %v394
    %v1041 = vunpack.c.l.b16 %v395
    %v1042 = vunpack.c.h.b16 %v395
    %v1043 = vunpack.c.l.b16 %v396
    %v1044 = vunpack.c.h.b16 %v396
    %v1045 = vunpack.c.l.b16 %v397
    %v1046 = vunpack.c.h.b16 %v397
    %v1047 = vunpack.c.l.b16 %v398
    %v1048 = vunpack.c.h.b16 %v398
    %v1049 = vunpack.c.l.b16 %v399
    %v1050 = vunpack.c.h.b16 %v399
    %v1051 = vunpack.c.l.b16 %v400
    %v1052 = vunpack.c.h.b16 %v400
    %v1053 = vunpack.c.l.b16 %v401
    %v1054 = vunpack.c.h.b16 %v401
    %v1055 = vunpack.c.l.b16 %v402
    %v1056 = vunpack.c.h.b16 %v402
    %v1057 = vunpack.c.l.b16 %v403
    %v1058 = vunpack.c.h.b16 %v403
    %v1059 = vunpack.c.l.b16 %v404
    %v1060 = vunpack.c.h.b16 %v404
    %v1061 = vunpack.c.l.b16 %v405
    %v1062 = vunpack.c.h.b16 %v405
    %v1063 = vunpack.c.l.b16 %v406
    %v1064 = vunpack.c.h.b16 %v406
    %v1065 = vunpack.c.l.b16 %v407
    %v1066 = vunpack.c.h.b16 %v407
    %v1067 = vunpack.c.l.b16 %v408
    %v1068 = vunpack.c.h.b16 %v408
    %v1069 = vunpack.c.l.b16 %v409
    %v1070 = vunpack.c.h.b16 %v409
    %v1071 = vunpack.c.l.b16 %v410
    %v1072 = vunpack.c.h.b16 %v410
    %v1073 = vunpack.c.l.b16 %v411
    %v1074 = vunpack.c.h.b16 %v411
    %v1075 = vunpack.c.l.b16 %v412
    %v1076 = vunpack.c.h.b16 %v412
    %v1077 = vunpack.c.l.b16 %v413
    %v1078 = vunpack.c.h.b16 %v413
    %v1079 = vunpack.c.l.b16 %v414
    %v1080 = vunpack.c.h.b16 %v414
    %v1081 = vunpack.c.l.b16 %v415
    %v1082 = vunpack.c.h.b16 %v415
    %v1083 = vunpack.c.l.b16 %v416
    %v1084 = vunpack.c.h.b16 %v416
    %v1085 = vunpack.c.l.b16 %v417
    %v1086 = vunpack.c.h.b16 %v417
    %v1087 = vunpack.c.l.b16 %v418
    %v1088 = vunpack.c.h.b16 %v418
    %v1089 = vunpack.c.l.b16 %v419
    %v1090 = vunpack.c.h.b16 %v419
    %v1091 = vunpack.c.l.b16 %v420
    %v1092 = vunpack.c.h.b16 %v420
    %v1093 = vunpack.c.l.b16 %v421
    %v1094 = vunpack.c.h.b16 %v421
    %v1095 = vunpack.c.l.b16 %v422
    %v1096 = vunpack.c.h.b16 %v422
    %v1097 = vunpack.c.l.b16 %v423
    %v1098 = vunpack.c.h.b16 %v423
    %v1099 = vunpack.c.l.b16 %v424
    %v1100 = vunpack.c.h.b16 %v424
    %v1101 = vunpack.c.l.b16 %v425
    %v1102 = vunpack.c.h.b16 %v425
    %v1103 = vunpack.c.l.b16 %v426
    %v1104 = vunpack.c.h.b16 %v426
    %v1105 = vunpack.c.l.b16 %v427
    %v1106 = vunpack.c.h.b16 %v427
    %v1107 = vunpack.c.l.b16 %v428
    %v1108 = vunpack.c.h.b16 %v428
    %v1109 = vunpack.c.l.b16 %v429
    %v1110 = vunpack.c.h.b16 %v429
    %v1111 = vunpack.c.l.b16 %v430
    %v1112 = vunpack.c.h.b16 %v430
    %v1113 = vunpack.c.l.b16 %v431
    %v1114 = vunpack.c.h.b16 %v431
    %v1115 = vunpack.c.l.b16 %v432
    %v1116 = vunpack.c.h.b16 %v432
    %v1117 = vunpack.c.l.b16 %v433
    %v1118 = vunpack.c.h.b16 %v433
    %v1119 = vunpack.c.l.b16 %v434
    %v1120 = vunpack.c.h.b16 %v434
    %v1121 = vunpack.c.l.b16 %v435
    %v1122 = vunpack.c.h.b16 %v435
    %v1123 = vunpack.c.l.b16 %v436
    %v1124 = vunpack.c.h.b16 %v436
    %v1125 = vunpack.c.l.b16 %v437
    %v1126 = vunpack.c.h.b16 %v437
    %v1127 = vunpack.c.l.b16 %v438
    %v1128 = vunpack.c.h.b16 %v438
    %v1129 = vunpack.c.l.b16 %v439
    %v1130 = vunpack.c.h.b16 %v439
    %v1131 = vunpack.c.l.b16 %v440
    %v1132 = vunpack.c.h.b16 %v440
    %v1133 = vunpack.c.l.b16 %v441
    %v1134 = vunpack.c.h.b16 %v441
    %v1135 = vunpack.c.l.b16 %v442
    %v1136 = vunpack.c.h.b16 %v442
    %v1137 = vunpack.c.l.b16 %v443
    %v1138 = vunpack.c.h.b16 %v443
    %v1139 = vunpack.c.l.b16 %v444
    %v1140 = vunpack.c.h.b16 %v444
    %v1141 = vunpack.c.l.b16 %v445
    %v1142 = vunpack.c.h.b16 %v445
    %v1143 = vunpack.c.l.b16 %v446
    %v1144 = vunpack.c.h.b16 %v446
    %v1145 = vunpack.c.l.b16 %v447
    %v1146 = vunpack.c.h.b16 %v447
    %v1147 = vunpack.c.l.b16 %v448
    %v1148 = vunpack.c.h.b16 %v448
    %v1149 = vunpack.c.l.b16 %v449
    %v1150 = vunpack.c.h.b16 %v449
    %v1151 = vunpack.c.l.b16 %v450
    %v1152 = vunpack.c.h.b16 %v450
    %v1153 = vunpack.c.l.b16 %v451
    %v1154 = vunpack.c.h.b16 %v451
    %v1155 = vunpack.c.l.b16 %v452
    %v1156 = vunpack.c.h.b16 %v452
    %v1157 = vunpack.c.l.b16 %v453
    %v1158 = vunpack.c.h.b16 %v453
    %v1159 = vunpack.c.l.b16 %v454
    %v1160 = vunpack.c.h.b16 %v454
    %v1161 = vunpack.c.l.b16 %v455
    %v1162 = vunpack.c.h.b16 %v455
    %v1163 = vunpack.c.l.b16 %v456
    %v1164 = vunpack.c.h.b16 %v456
    %v1165 = vunpack.c.l.b16 %v457
    %v1166 = vunpack.c.h.b16 %v457
    %v1167 = vunpack.c.l.b16 %v458
    %v1168 = vunpack.c.h.b16 %v458
    %v1169 = vunpack.c.l.b16 %v459
    %v1170 = vunpack.c.h.b16 %v459
    %v1171 = vunpack.c.l.b16 %v460
    %v1172 = vunpack.c.h.b16 %v460
    %v1173 = vunpack.c.l.b16 %v461
    %v1174 = vunpack.c.h.b16 %v461
    %v1175 = vunpack.c.l.b16 %v462
    %v1176 = vunpack.c.h.b16 %v462
    %v1177 = vunpack.c.l.b16 %v463
    %v1178 = vunpack.c.h.b16 %v463
    %v1179 = vunpack.c.l.b16 %v464
    %v1180 = vunpack.c.h.b16 %v464
    %v1181 = vunpack.c.l.b16 %v465
    %v1182 = vunpack.c.h.b16 %v465
    %v1183 = vunpack.c.l.b16 %v466
    %v1184 = vunpack.c.h.b16 %v466
    %v1185 = vunpack.c.l.b16 %v467
    %v1186 = vunpack.c.h.b16 %v467
    %v1187 = vunpack.c.l.b16 %v468
    %v1188 = vunpack.c.h.b16 %v468
    %v1189 = vunpack.c.l.b16 %v469
    %v1190 = vunpack.c.h.b16 %v469
    %v1191 = vunpack.c.l.b16 %v470
    %v1192 = vunpack.c.h.b16 %v470
    %v1193 = vunpack.c.l.b16 %v471
    %v1194 = vunpack.c.h.b16 %v471
    %v1195 = vunpack.c.l.b16 %v472
    %v1196 = vunpack.c.h.b16 %v472
    %v1197 = vunpack.c.l.b16 %v473
    %v1198 = vunpack.c.h.b16 %v473
    %v1199 = vunpack.c.l.b16 %v474
    %v1200 = vunpack.c.h.b16 %v474
    %v1201 = vunpack.c.l.b16 %v475
    %v1202 = vunpack.c.h.b16 %v475
    %v1203 = vunpack.c.l.b16 %v476
    %v1204 = vunpack.c.h.b16 %v476
    %v1205 = vunpack.c.l.b16 %v477
    %v1206 = vunpack.c.h.b16 %v477
    %v1207 = vunpack.c.l.b16 %v478
    %v1208 = vunpack.c.h.b16 %v478
    %v1209 = vunpack.c.l.b16 %v479
    %v1210 = vunpack.c.h.b16 %v479
    %v1211 = vunpack.c.l.b16 %v480
    %v1212 = vunpack.c.h.b16 %v480
    %v1213 = vunpack.c.l.b16 %v481
    %v1214 = vunpack.c.h.b16 %v481
    %v1215 = vunpack.c.l.b16 %v482
    %v1216 = vunpack.c.h.b16 %v482
    %v1217 = vunpack.c.l.b16 %v483
    %v1218 = vunpack.c.h.b16 %v483
    %v1219 = vunpack.c.l.b16 %v484
    %v1220 = vunpack.c.h.b16 %v484
    %v1221 = vunpack.c.l.b16 %v485
    %v1222 = vunpack.c.h.b16 %v485
    %v1223 = vunpack.c.l.b16 %v486
    %v1224 = vunpack.c.h.b16 %v486
    %v1225 = vunpack.c.l.b16 %v487
    %v1226 = vunpack.c.h.b16 %v487
    %v1227 = vunpack.c.l.b16 %v488
    %v1228 = vunpack.c.h.b16 %v488
    %v1229 = vunpack.c.l.b16 %v489
    %v1230 = vunpack.c.h.b16 %v489
    %v1231 = vunpack.c.l.b16 %v490
    %v1232 = vunpack.c.h.b16 %v490
    %v1233 = vunpack.c.l.b16 %v491
    %v1234 = vunpack.c.h.b16 %v491
    %v1235 = vunpack.c.l.b16 %v492
    %v1236 = vunpack.c.h.b16 %v492
    %v1237 = vunpack.c.l.b16 %v493
    %v1238 = vunpack.c.h.b16 %v493
    %v1239 = vunpack.c.l.b16 %v494
    %v1240 = vunpack.c.h.b16 %v494
    %v1241 = vunpack.c.l.b16 %v495
    %v1242 = vunpack.c.h.b16 %v495
    %v1243 = vunpack.c.l.b16 %v496
    %v1244 = vunpack.c.h.b16 %v496
    %v1245 = vunpack.c.l.b16 %v497
    %v1246 = vunpack.c.h.b16 %v497
    %v1247 = vunpack.c.l.b16 %v498
    %v1248 = vunpack.c.h.b16 %v498
    %v1249 = vunpack.c.l.b16 %v499
    %v1250 = vunpack.c.h.b16 %v499
    %v1251 = vunpack.c.l.b16 %v500
    %v1252 = vunpack.c.h.b16 %v500
    %v1253 = vunpack.c.l.b16 %v501
    %v1254 = vunpack.c.h.b16 %v501
    %v1255 = vunpack.c.l.b16 %v502
    %v1256 = vunpack.c.h.b16 %v502
    %v1257 = vunpack.c.l.b16 %v503
    %v1258 = vunpack.c.h.b16 %v503
    %v1259 = vunpack.c.l.b16 %v504
    %v1260 = vunpack.c.h.b16 %v504
    %v1261 = vunpack.c.l.b16 %v505
    %v1262 = vunpack.c.h.b16 %v505
    %v1263 = vunpack.c.l.b16 %v506
    %v1264 = vunpack.c.h.b16 %v506
    %v1265 = vunpack.c.l.b16 %v507
    %v1266 = vunpack.c.h.b16 %v507
    %v1267 = vunpack.c.l.b16 %v508
    %v1268 = vunpack.c.h.b16 %v508
    %v1269 = vunpack.c.l.b16 %v509
    %v1270 = vunpack.c.h.b16 %v509
    %v1271 = vunpack.c.l.b16 %v510
    %v1272 = vunpack.c.h.b16 %v510
    %v1273 = vunpack.c.l.b16 %v511
    %v1274 = vunpack.c.h.b16 %v511
    %v1275 = vunpack.c.l.b16 %v512
    %v1276 = vunpack.c.h.b16 %v512
    %v1277 = vunpack.c.l.b16 %v513
    %v1278 = vunpack.c.h.b16 %v513
    %v1279 = vunpack.c.l.b16 %v514
    %v1280 = vunpack.c.h.b16 %v514
    %v1281 = vunpack.c.l.b16 %v515
    %v1282 = vunpack.c.h.b16 %v515
    %v1283 = vunpack.c.l.b16 %v516
    %v1284 = vunpack.c.h.b16 %v516
    %v1285 = vunpack.c.l.b16 %v517
    %v1286 = vunpack.c.h.b16 %v517
    %v1287 = vunpack.c.l.b16 %v518
    %v1288 = vunpack.c.h.b16 %v518
    %v1289 = vunpack.c.l.b16 %v519
    %v1290 = vunpack.c.h.b16 %v519
    %v1291 = vunpack.c.l.b16 %v520
    %v1292 = vunpack.c.h.b16 %v520
    %v1293 = vunpack.c.l.b16 %v521
    %v1294 = vunpack.c.h.b16 %v521
    %v1295 = vunpack.c.l.b16 %v522
    %v1296 = vunpack.c.h.b16 %v522
    %v1297 = vunpack.c.l.b16 %v523
    %v1298 = vunpack.c.h.b16 %v523
    %v1299 = vunpack.c.l.b16 %v524
    %v1300 = vunpack.c.h.b16 %v524
    %v1301 = vunpack.c.l.b16 %v525
    %v1302 = vunpack.c.h.b16 %v525
    %v1303 = vunpack.c.l.b16 %v526
    %v1304 = vunpack.c.h.b16 %v526
    %v1305 = vunpack.c.l.b16 %v527
    %v1306 = vunpack.c.h.b16 %v527
    %v1307 = vunpack.c.l.b16 %v528
    %v1308 = vunpack.c.h.b16 %v528
    %v1309 = vunpack.c.l.b16 %v529
    %v1310 = vunpack.c.h.b16 %v529
    %v1311 = vunpack.c.l.b16 %v530
    %v1312 = vunpack.c.h.b16 %v530
    %v1313 = vunpack.c.l.b16 %v531
    %v1314 = vunpack.c.h.b16 %v531
    %v1315 = vunpack.c.l.b16 %v532
    %v1316 = vunpack.c.h.b16 %v532
    %v1317 = vunpack.c.l.b16 %v533
    %v1318 = vunpack.c.h.b16 %v533
    %v1319 = vunpack.c.l.b16 %v534
    %v1320 = vunpack.c.h.b16 %v534
    %v1321 = vpack.c.b16 %v817, %v809
    %v1322 = vpack.c.b16 %v818, %v810
    %v1323 = vpack.c.b16 %v819, %v811
    %v1324 = vpack.c.b16 %v820, %v812
    %v1325 = vpack.c.b16 %v821, %v813
    %v1326 = vpack.c.b16 %v822, %v814
    %v1327 = vpack.c.b16 %v823, %v815
    %v1328 = vpack.c.b16 %v824, %v816
    %v1329 = vpack.c.b16 %v833, %v825
    %v1330 = vpack.c.b16 %v834, %v826
    %v1331 = vpack.c.b16 %v835, %v827
    %v1332 = vpack.c.b16 %v836, %v828
    %v1333 = vpack.c.b16 %v837, %v829
    %v1334 = vpack.c.b16 %v838, %v830
    %v1335 = vpack.c.b16 %v839, %v831
    %v1336 = vpack.c.b16 %v840, %v832
    %v1337 = vpack.c.b16 %v849, %v841
    %v1338 = vpack.c.b16 %v850, %v842
    %v1339 = vpack.c.b16 %v851, %v843
    %v1340 = vpack.c.b16 %v852, %v844
    %v1341 = vpack.c.b16 %v853, %v845
    %v1342 = vpack.c.b16 %v854, %v846
    %v1343 = vpack.c.b16 %v855, %v847
    %v1344 = vpack.c.b16 %v856, %v848
    %v1345 = vpack.c.b16 %v865, %v857
    %v1346 = vpack.c.b16 %v866, %v858
    %v1347 = vpack.c.b16 %v867, %v859
    %v1348 = vpack.c.b16 %v868, %v860
    %v1349 = vpack.c.b16 %v869, %v861
    %v1350 = vpack.c.b16 %v870, %v862
    %v1351 = vpack.c.b16 %v871, %v863
    %v1352 = vpack.c.b16 %v872, %v864
    %v1353 = vpack.c.b16 %v881, %v873
    %v1354 = vpack.c.b16 %v882, %v874
    %v1355 = vpack.c.b16 %v883, %v875
    %v1356 = vpack.c.b16 %v884, %v876
    %v1357 = vpack.c.b16 %v885, %v877
    %v1358 = vpack.c.b16 %v886, %v878
    %v1359 = vpack.c.b16 %v887, %v879
    %v1360 = vpack.c.b16 %v888, %v880
    %v1361 = vpack.c.b16 %v897, %v889
    %v1362 = vpack.c.b16 %v898, %v890
    %v1363 = vpack.c.b16 %v899, %v891
    %v1364 = vpack.c.b16 %v900, %v892
    %v1365 = vpack.c.b16 %v901, %v893
    %v1366 = vpack.c.b16 %v902, %v894
    %v1367 = vpack.c.b16 %v903, %v895
    %v1368 = vpack.c.b16 %v904, %v896
    %v1369 = vpack.c.b16 %v913, %v905
    %v1370 = vpack.c.b16 %v914, %v906
    %v1371 = vpack.c.b16 %v915, %v907
    %v1372 = vpack.c.b16 %v916, %v908
    %v1373 = vpack.c.b16 %v917, %v909
    %v1374 = vpack.c.b16 %v918, %v910
    %v1375 = vpack.c.b16 %v919, %v911
    %v1376 = vpack.c.b16 %v920, %v912
    %v1377 = vpack.c.b16 %v929, %v921
    %v1378 = vpack.c.b16 %v930, %v922
    %v1379 = vpack.c.b16 %v931, %v923
    %v1380 = vpack.c.b16 %v932, %v924
    %v1381 = vpack.c.b16 %v933, %v925
    %v1382 = vpack.c.b16 %v934, %v926
    %v1383 = vpack.c.b16 %v935, %v927
    %v1384 = vpack.c.b16 %v936, %v928
    %v1385 = vpack.c.b16 %v945, %v937
    %v1386 = vpack.c.b16 %v946, %v938
    %v1387 = vpack.c.b16 %v947, %v939
    %v1388 = vpack.c.b16 %v948, %v940
    %v1389 = vpack.c.b16 %v949, %v941
    %v1390 = vpack.c.b16 %v950, %v942
    %v1391 = vpack.c.b16 %v951, %v943
    %v1392 = vpack.c.b16 %v952, %v944
    %v1393 = vpack.c.b16 %v961, %v953
    %v1394 = vpack.c.b16 %v962, %v954
    %v1395 = vpack.c.b16 %v963, %v955
    %v1396 = vpack.c.b16 %v964, %v956
    %v1397 = vpack.c.b16 %v965, %v957
    %v1398 = vpack.c.b16 %v966, %v958
    %v1399 = vpack.c.b16 %v967, %v959
    %v1400 = vpack.c.b16 %v968, %v960
    %v1401 = vpack.c.b16 %v977, %v969
    %v1402 = vpack.c.b16 %v978, %v970
    %v1403 = vpack.c.b16 %v979, %v971
    %v1404 = vpack.c.b16 %v980, %v972
    %v1405 = vpack.c.b16 %v981, %v973
    %v1406 = vpack.c.b16 %v982, %v974
    %v1407 = vpack.c.b16 %v983, %v975
    %v1408 = vpack.c.b16 %v984, %v976
    %v1409 = vpack.c.b16 %v993, %v985
    %v1410 = vpack.c.b16 %v994, %v986
    %v1411 = vpack.c.b16 %v995, %v987
    %v1412 = vpack.c.b16 %v996, %v988
    %v1413 = vpack.c.b16 %v997, %v989
    %v1414 = vpack.c.b16 %v998, %v990
    %v1415 = vpack.c.b16 %v999, %v991
    %v1416 = vpack.c.b16 %v1000, %v992
    %v1417 = vpack.c.b16 %v1009, %v1001
    %v1418 = vpack.c.b16 %v1010, %v1002
    %v1419 = vpack.c.b16 %v1011, %v1003
    %v1420 = vpack.c.b16 %v1012, %v1004
    %v1421 = vpack.c.b16 %v1013, %v1005
    %v1422 = vpack.c.b16 %v1014, %v1006
    %v1423 = vpack.c.b16 %v1015, %v1007
    %v1424 = vpack.c.b16 %v1016, %v1008
    %v1425 = vpack.c.b16 %v1025, %v1017
    %v1426 = vpack.c.b16 %v1026, %v1018
    %v1427 = vpack.c.b16 %v1027, %v1019
    %v1428 = vpack.c.b16 %v1028, %v1020
    %v1429 = vpack.c.b16 %v1029, %v1021
    %v1430 = vpack.c.b16 %v1030, %v1022
    %v1431 = vpack.c.b16 %v1031, %v1023
    %v1432 = vpack.c.b16 %v1032, %v1024
    %v1433 = vpack.c.b16 %v1041, %v1033
    %v1434 = vpack.c.b16 %v1042, %v1034
    %v1435 = vpack.c.b16 %v1043, %v1035
    %v1436 = vpack.c.b16 %v1044, %v1036
    %v1437 = vpack.c.b16 %v1045, %v1037
    %v1438 = vpack.c.b16 %v1046, %v1038
    %v1439 = vpack.c.b16 %v1047, %v1039
    %v1440 = vpack.c.b16 %v1048, %v1040
    %v1441 = vpack.c.b16 %v1057, %v1049
    %v1442 = vpack.c.b16 %v1058, %v1050
    %v1443 = vpack.c.b16 %v1059, %v1051
    %v1444 = vpack.c.b16 %v1060, %v1052
    %v1445 = vpack.c.b16 %v1061, %v1053
    %v1446 = vpack.c.b16 %v1062, %v1054
    %v1447 = vpack.c.b16 %v1063, %v1055
    %v1448 = vpack.c.b16 %v1064, %v1056
    %v1449 = vpack.c.b16 %v1073, %v1065
    %v1450 = vpack.c.b16 %v1074, %v1066
    %v1451 = vpack.c.b16 %v1075, %v1067
    %v1452 = vpack.c.b16 %v1076, %v1068
    %v1453 = vpack.c.b16 %v1077, %v1069
    %v1454 = vpack.c.b16 %v1078, %v1070
    %v1455 = vpack.c.b16 %v1079, %v1071
    %v1456 = vpack.c.b16 %v1080, %v1072
    %v1457 = vpack.c.b16 %v1089, %v1081
    %v1458 = vpack.c.b16 %v1090, %v1082
    %v1459 = vpack.c.b16 %v1091, %v1083
    %v1460 = vpack.c.b16 %v1092, %v1084
    %v1461 = vpack.c.b16 %v1093, %v1085
    %v1462 = vpack.c.b16 %v1094, %v1086
    %v1463 = vpack.c.b16 %v1095, %v1087
    %v1464 = vpack.c.b16 %v1096, %v1088
    %v1465 = vpack.c.b16 %v1105, %v1097
    %v1466 = vpack.c.b16 %v1106, %v1098
    %v1467 = vpack.c.b16 %v1107, %v1099
    %v1468 = vpack.c.b16 %v1108, %v1100
    %v1469 = vpack.c.b16 %v1109, %v1101
    %v1470 = vpack.c.b16 %v1110, %v1102
    %v1471 = vpack.c.b16 %v1111, %v1103
    %v1472 = vpack.c.b16 %v1112, %v1104
    %v1473 = vpack.c.b16 %v1121, %v1113
    %v1474 = vpack.c.b16 %v1122, %v1114
    %v1475 = vpack.c.b16 %v1123, %v1115
    %v1476 = vpack.c.b16 %v1124, %v1116
    %v1477 = vpack.c.b16 %v1125, %v1117
    %v1478 = vpack.c.b16 %v1126, %v1118
    %v1479 = vpack.c.b16 %v1127, %v1119
    %v1480 = vpack.c.b16 %v1128, %v1120
    %v1481 = vpack.c.b16 %v1137, %v1129
    %v1482 = vpack.c.b16 %v1138, %v1130
    %v1483 = vpack.c.b16 %v1139, %v1131
    %v1484 = vpack.c.b16 %v1140, %v1132
    %v1485 = vpack.c.b16 %v1141, %v1133
    %v1486 = vpack.c.b16 %v1142, %v1134
    %v1487 = vpack.c.b16 %v1143, %v1135
    %v1488 = vpack.c.b16 %v1144, %v1136
    %v1489 = vpack.c.b16 %v1153, %v1145
    %v1490 = vpack.c.b16 %v1154, %v1146
    %v1491 = vpack.c.b16 %v1155, %v1147
    %v1492 = vpack.c.b16 %v1156, %v1148
    %v1493 = vpack.c.b16 %v1157, %v1149
    %v1494 = vpack.c.b16 %v1158, %v1150
    %v1495 = vpack.c.b16 %v1159, %v1151
    %v1496 = vpack.c.b16 %v1160, %v1152
    %v1497 = vpack.c.b16 %v1169, %v1161
    %v1498 = vpack.c.b16 %v1170, %v1162
    %v1499 = vpack.c.b16 %v1171, %v1163
    %v1500 = vpack.c.b16 %v1172, %v1164
    %v1501 = vpack.c.b16 %v1173, %v1165
    %v1502 = vpack.c.b16 %v1174, %v1166
    %v1503 = vpack.c.b16 %v1175, %v1167
    %v1504 = vpack.c.b16 %v1176, %v1168
    %v1505 = vpack.c.b16 %v1185, %v1177
    %v1506 = vpack.c.b16 %v1186, %v1178
    %v1507 = vpack.c.b16 %v1187, %v1179
    %v1508 = vpack.c.b16 %v1188, %v1180
    %v1509 = vpack.c.b16 %v1189, %v1181
    %v1510 = vpack.c.b16 %v1190, %v1182
    %v1511 = vpack.c.b16 %v1191, %v1183
    %v1512 = vpack.c.b16 %v1192, %v1184
    %v1513 = vpack.c.b16 %v1201, %v1193
    %v1514 = vpack.c.b16 %v1202, %v1194
    %v1515 = vpack.c.b16 %v1203, %v1195
    %v1516 = vpack.c.b16 %v1204, %v1196
    %v1517 = vpack.c.b16 %v1205, %v1197
    %v1518 = vpack.c.b16 %v1206, %v1198
    %v1519 = vpack.c.b16 %v1207, %v1199
    %v1520 = vpack.c.b16 %v1208, %v1200
    %v1521 = vpack.c.b16 %v1217, %v1209
    %v1522 = vpack.c.b16 %v1218, %v1210
    %v1523 = vpack.c.b16 %v1219, %v1211
    %v1524 = vpack.c.b16 %v1220, %v1212
    %v1525 = vpack.c.b16 %v1221, %v1213
    %v1526 = vpack.c.b16 %v1222, %v1214
    %v1527 = vpack.c.b16 %v1223, %v1215
    %v1528 = vpack.c.b16 %v1224, %v1216
    %v1529 = vpack.c.b16 %v1233, %v1225
    %v1530 = vpack.c.b16 %v1234, %v1226
    %v1531 = vpack.c.b16 %v1235, %v1227
    %v1532 = vpack.c.b16 %v1236, %v1228
    %v1533 = vpack.c.b16 %v1237, %v1229
    %v1534 = vpack.c.b16 %v1238, %v1230
    %v1535 = vpack.c.b16 %v1239, %v1231
    %v1536 = vpack.c.b16 %v1240, %v1232
    %v1537 = vpack.c.b16 %v1249, %v1241
    %v1538 = vpack.c.b16 %v1250, %v1242
    %v1539 = vpack.c.b16 %v1251, %v1243
    %v1540 = vpack.c.b16 %v1252, %v1244
    %v1541 = vpack.c.b16 %v1253, %v1245
    %v1542 = vpack.c.b16 %v1254, %v1246
    %v1543 = vpack.c.b16 %v1255, %v1247
    %v1544 = vpack.c.b16 %v1256, %v1248
    %v1545 = vpack.c.b16 %v1265, %v1257
    %v1546 = vpack.c.b16 %v1266, %v1258
    %v1547 = vpack.c.b16 %v1267, %v1259
    %v1548 = vpack.c.b16 %v1268, %v1260
    %v1549 = vpack.c.b16 %v1269, %v1261
    %v1550 = vpack.c.b16 %v1270, %v1262
    %v1551 = vpack.c.b16 %v1271, %v1263
    %v1552 = vpack.c.b16 %v1272, %v1264
    %v1553 = vpack.c.b16 %v1281, %v1273
    %v1554 = vpack.c.b16 %v1282, %v1274
    %v1555 = vpack.c.b16 %v1283, %v1275
    %v1556 = vpack.c.b16 %v1284, %v1276
    %v1557 = vpack.c.b16 %v1285, %v1277
    %v1558 = vpack.c.b16 %v1286, %v1278
    %v1559 = vpack.c.b16 %v1287, %v1279
    %v1560 = vpack.c.b16 %v1288, %v1280
    %v1561 = vpack.c.b16 %v1297, %v1289
    %v1562 = vpack.c.b16 %v1298, %v1290
    %v1563 = vpack.c.b16 %v1299, %v1291
    %v1564 = vpack.c.b16 %v1300, %v1292
    %v1565 = vpack.c.b16 %v1301, %v1293
    %v1566 = vpack.c.b16 %v1302, %v1294
    %v1567 = vpack.c.b16 %v1303, %v1295
    %v1568 = vpack.c.b16 %v1304, %v1296
    %v1569 = vpack.c.b16 %v1313, %v1305
    %v1570 = vpack.c.b16 %v1314, %v1306
    %v1571 = vpack.c.b16 %v1315, %v1307
    %v1572 = vpack.c.b16 %v1316, %v1308
    %v1573 = vpack.c.b16 %v1317, %v1309
    %v1574 = vpack.c.b16 %v1318, %v1310
    %v1575 = vpack.c.b16 %v1319, %v1311
    %v1576 = vpack.c.b16 %v1320, %v1312
    %1833 = vmatpush.bf16.msra.mxu0 %v1377
    %1834 = vmatpush.bf16.msra.mxu0 %v1369
    %1835 = vmatpush.bf16.msra.mxu0 %v1361
    %1836 = vmatpush.bf16.msra.mxu0 %v1353
    %1837 = vmatpush.bf16.msra.mxu0 %v1345
    %1838 = vmatpush.bf16.msra.mxu0 %v1337
    %1839 = vmatpush.bf16.msra.mxu0 %v1329
    %1840 = vmatpush.bf16.msra.mxu0 %v1321
    %1841 = vmatmul.bf16.gmra.mxu0 %v275
    %v1842 = vpop.f32.mrf.mxu0
    %v1843 = vadd.f32 %v537, %v1842
    %v1844 = vpop.f32.mrf.mxu0
    %v1845 = vadd.f32 %v537, %v1844
    %1846 = vdwg.mxu0
    %1847 = vmatpush.bf16.msra.mxu0 %v1441
    %1848 = vmatpush.bf16.msra.mxu0 %v1433
    %1849 = vmatpush.bf16.msra.mxu0 %v1425
    %1850 = vmatpush.bf16.msra.mxu0 %v1417
    %1851 = vmatpush.bf16.msra.mxu0 %v1409
    %1852 = vmatpush.bf16.msra.mxu0 %v1401
    %1853 = vmatpush.bf16.msra.mxu0 %v1393
    %1854 = vmatpush.bf16.msra.mxu0 %v1385
    %1855 = vmatmul.bf16.gmra.mxu0 %v276
    %v1856 = vpop.f32.mrf.mxu0
    %v1857 = vadd.f32 %v1843, %v1856
    %v1858 = vpop.f32.mrf.mxu0
    %v1859 = vadd.f32 %v1845, %v1858
    %1860 = vdwg.mxu0
    %1861 = vmatpush.bf16.msra.mxu0 %v1505
    %1862 = vmatpush.bf16.msra.mxu0 %v1497
    %1863 = vmatpush.bf16.msra.mxu0 %v1489
    %1864 = vmatpush.bf16.msra.mxu0 %v1481
    %1865 = vmatpush.bf16.msra.mxu0 %v1473
    %1866 = vmatpush.bf16.msra.mxu0 %v1465
    %1867 = vmatpush.bf16.msra.mxu0 %v1457
    %1868 = vmatpush.bf16.msra.mxu0 %v1449
    %1869 = vmatmul.bf16.gmra.mxu0 %v277
    %v1870 = vpop.f32.mrf.mxu0
    %v1871 = vadd.f32 %v1857, %v1870
    %v1872 = vpop.f32.mrf.mxu0
    %v1873 = vadd.f32 %v1859, %v1872
    %1874 = vdwg.mxu0
    %1875 = vmatpush.bf16.msra.mxu0 %v1569
    %1876 = vmatpush.bf16.msra.mxu0 %v1561
    %1877 = vmatpush.bf16.msra.mxu0 %v1553
    %1878 = vmatpush.bf16.msra.mxu0 %v1545
    %1879 = vmatpush.bf16.msra.mxu0 %v1537
    %1880 = vmatpush.bf16.msra.mxu0 %v1529
    %1881 = vmatpush.bf16.msra.mxu0 %v1521
    %1882 = vmatpush.bf16.msra.mxu0 %v1513
    %1883 = vmatmul.bf16.gmra.mxu0 %v278
    %v1884 = vpop.f32.mrf.mxu0
    %v1885 = vadd.f32 %v1871, %v1884
    %v1886 = vpop.f32.mrf.mxu0
    %v1887 = vadd.f32 %v1873, %v1886
    %1888 = vdwg.mxu0
    %1889 = vmatpush.bf16.msra.mxu0 %v1378
    %1890 = vmatpush.bf16.msra.mxu0 %v1370
    %1891 = vmatpush.bf16.msra.mxu0 %v1362
    %1892 = vmatpush.bf16.msra.mxu0 %v1354
    %1893 = vmatpush.bf16.msra.mxu0 %v1346
    %1894 = vmatpush.bf16.msra.mxu0 %v1338
    %1895 = vmatpush.bf16.msra.mxu0 %v1330
    %1896 = vmatpush.bf16.msra.mxu0 %v1322
    %1897 = vmatmul.bf16.gmra.mxu0 %v275
    %v1898 = vpop.f32.mrf.mxu0
    %v1899 = vadd.f32 %v538, %v1898
    %v1900 = vpop.f32.mrf.mxu0
    %v1901 = vadd.f32 %v538, %v1900
    %1902 = vdwg.mxu0
    %1903 = vmatpush.bf16.msra.mxu0 %v1442
    %1904 = vmatpush.bf16.msra.mxu0 %v1434
    %1905 = vmatpush.bf16.msra.mxu0 %v1426
    %1906 = vmatpush.bf16.msra.mxu0 %v1418
    %1907 = vmatpush.bf16.msra.mxu0 %v1410
    %1908 = vmatpush.bf16.msra.mxu0 %v1402
    %1909 = vmatpush.bf16.msra.mxu0 %v1394
    %1910 = vmatpush.bf16.msra.mxu0 %v1386
    %1911 = vmatmul.bf16.gmra.mxu0 %v276
    %v1912 = vpop.f32.mrf.mxu0
    %v1913 = vadd.f32 %v1899, %v1912
    %v1914 = vpop.f32.mrf.mxu0
    %v1915 = vadd.f32 %v1901, %v1914
    %1916 = vdwg.mxu0
    %1917 = vmatpush.bf16.msra.mxu0 %v1506
    %1918 = vmatpush.bf16.msra.mxu0 %v1498
    %1919 = vmatpush.bf16.msra.mxu0 %v1490
    %1920 = vmatpush.bf16.msra.mxu0 %v1482
    %1921 = vmatpush.bf16.msra.mxu0 %v1474
    %1922 = vmatpush.bf16.msra.mxu0 %v1466
    %1923 = vmatpush.bf16.msra.mxu0 %v1458
    %1924 = vmatpush.bf16.msra.mxu0 %v1450
    %1925 = vmatmul.bf16.gmra.mxu0 %v277
    %v1926 = vpop.f32.mrf.mxu0
    %v1927 = vadd.f32 %v1913, %v1926
    %v1928 = vpop.f32.mrf.mxu0
    %v1929 = vadd.f32 %v1915, %v1928
    %1930 = vdwg.mxu0
    %1931 = vmatpush.bf16.msra.mxu0 %v1570
    %1932 = vmatpush.bf16.msra.mxu0 %v1562
    %1933 = vmatpush.bf16.msra.mxu0 %v1554
    %1934 = vmatpush.bf16.msra.mxu0 %v1546
    %1935 = vmatpush.bf16.msra.mxu0 %v1538
    %1936 = vmatpush.bf16.msra.mxu0 %v1530
    %1937 = vmatpush.bf16.msra.mxu0 %v1522
    %1938 = vmatpush.bf16.msra.mxu0 %v1514
    %1939 = vmatmul.bf16.gmra.mxu0 %v278
    %v1940 = vpop.f32.mrf.mxu0
    %v1941 = vadd.f32 %v1927, %v1940
    %v1942 = vpop.f32.mrf.mxu0
    %v1943 = vadd.f32 %v1929, %v1942
    %1944 = vdwg.mxu0
    %1945 = vmatpush.bf16.msra.mxu0 %v1379
    %1946 = vmatpush.bf16.msra.mxu0 %v1371
    %1947 = vmatpush.bf16.msra.mxu0 %v1363
    %1948 = vmatpush.bf16.msra.mxu0 %v1355
    %1949 = vmatpush.bf16.msra.mxu0 %v1347
    %1950 = vmatpush.bf16.msra.mxu0 %v1339
    %1951 = vmatpush.bf16.msra.mxu0 %v1331
    %1952 = vmatpush.bf16.msra.mxu0 %v1323
    %1953 = vmatmul.bf16.gmra.mxu0 %v275
    %v1954 = vpop.f32.mrf.mxu0
    %v1955 = vadd.f32 %v539, %v1954
    %v1956 = vpop.f32.mrf.mxu0
    %v1957 = vadd.f32 %v539, %v1956
    %1958 = vdwg.mxu0
    %1959 = vmatpush.bf16.msra.mxu0 %v1443
    %1960 = vmatpush.bf16.msra.mxu0 %v1435
    %1961 = vmatpush.bf16.msra.mxu0 %v1427
    %1962 = vmatpush.bf16.msra.mxu0 %v1419
    %1963 = vmatpush.bf16.msra.mxu0 %v1411
    %1964 = vmatpush.bf16.msra.mxu0 %v1403
    %1965 = vmatpush.bf16.msra.mxu0 %v1395
    %1966 = vmatpush.bf16.msra.mxu0 %v1387
    %1967 = vmatmul.bf16.gmra.mxu0 %v276
    %v1968 = vpop.f32.mrf.mxu0
    %v1969 = vadd.f32 %v1955, %v1968
    %v1970 = vpop.f32.mrf.mxu0
    %v1971 = vadd.f32 %v1957, %v1970
    %1972 = vdwg.mxu0
    %1973 = vmatpush.bf16.msra.mxu0 %v1507
    %1974 = vmatpush.bf16.msra.mxu0 %v1499
    %1975 = vmatpush.bf16.msra.mxu0 %v1491
    %1976 = vmatpush.bf16.msra.mxu0 %v1483
    %1977 = vmatpush.bf16.msra.mxu0 %v1475
    %1978 = vmatpush.bf16.msra.mxu0 %v1467
    %1979 = vmatpush.bf16.msra.mxu0 %v1459
    %1980 = vmatpush.bf16.msra.mxu0 %v1451
    %1981 = vmatmul.bf16.gmra.mxu0 %v277
    %v1982 = vpop.f32.mrf.mxu0
    %v1983 = vadd.f32 %v1969, %v1982
    %v1984 = vpop.f32.mrf.mxu0
    %v1985 = vadd.f32 %v1971, %v1984
    %1986 = vdwg.mxu0
    %1987 = vmatpush.bf16.msra.mxu0 %v1571
    %1988 = vmatpush.bf16.msra.mxu0 %v1563
    %1989 = vmatpush.bf16.msra.mxu0 %v1555
    %1990 = vmatpush.bf16.msra.mxu0 %v1547
    %1991 = vmatpush.bf16.msra.mxu0 %v1539
    %1992 = vmatpush.bf16.msra.mxu0 %v1531
    %1993 = vmatpush.bf16.msra.mxu0 %v1523
    %1994 = vmatpush.bf16.msra.mxu0 %v1515
    %1995 = vmatmul.bf16.gmra.mxu0 %v278
    %v1996 = vpop.f32.mrf.mxu0
    %v1997 = vadd.f32 %v1983, %v1996
    %v1998 = vpop.f32.mrf.mxu0
    %v1999 = vadd.f32 %v1985, %v1998
    %2000 = vdwg.mxu0
    %2001 = vmatpush.bf16.msra.mxu0 %v1380
    %2002 = vmatpush.bf16.msra.mxu0 %v1372
    %2003 = vmatpush.bf16.msra.mxu0 %v1364
    %2004 = vmatpush.bf16.msra.mxu0 %v1356
    %2005 = vmatpush.bf16.msra.mxu0 %v1348
    %2006 = vmatpush.bf16.msra.mxu0 %v1340
    %2007 = vmatpush.bf16.msra.mxu0 %v1332
    %2008 = vmatpush.bf16.msra.mxu0 %v1324
    %2009 = vmatmul.bf16.gmra.mxu0 %v275
    %v2010 = vpop.f32.mrf.mxu0
    %v2011 = vadd.f32 %v540, %v2010
    %v2012 = vpop.f32.mrf.mxu0
    %v2013 = vadd.f32 %v540, %v2012
    %2014 = vdwg.mxu0
    %2015 = vmatpush.bf16.msra.mxu0 %v1444
    %2016 = vmatpush.bf16.msra.mxu0 %v1436
    %2017 = vmatpush.bf16.msra.mxu0 %v1428
    %2018 = vmatpush.bf16.msra.mxu0 %v1420
    %2019 = vmatpush.bf16.msra.mxu0 %v1412
    %2020 = vmatpush.bf16.msra.mxu0 %v1404
    %2021 = vmatpush.bf16.msra.mxu0 %v1396
    %2022 = vmatpush.bf16.msra.mxu0 %v1388
    %2023 = vmatmul.bf16.gmra.mxu0 %v276
    %v2024 = vpop.f32.mrf.mxu0
    %v2025 = vadd.f32 %v2011, %v2024
    %v2026 = vpop.f32.mrf.mxu0
    %v2027 = vadd.f32 %v2013, %v2026
    %2028 = vdwg.mxu0
    %2029 = vmatpush.bf16.msra.mxu0 %v1508
    %2030 = vmatpush.bf16.msra.mxu0 %v1500
    %2031 = vmatpush.bf16.msra.mxu0 %v1492
    %2032 = vmatpush.bf16.msra.mxu0 %v1484
    %2033 = vmatpush.bf16.msra.mxu0 %v1476
    %2034 = vmatpush.bf16.msra.mxu0 %v1468
    %2035 = vmatpush.bf16.msra.mxu0 %v1460
    %2036 = vmatpush.bf16.msra.mxu0 %v1452
    %2037 = vmatmul.bf16.gmra.mxu0 %v277
    %v2038 = vpop.f32.mrf.mxu0
    %v2039 = vadd.f32 %v2025, %v2038
    %v2040 = vpop.f32.mrf.mxu0
    %v2041 = vadd.f32 %v2027, %v2040
    %2042 = vdwg.mxu0
    %2043 = vmatpush.bf16.msra.mxu0 %v1572
    %2044 = vmatpush.bf16.msra.mxu0 %v1564
    %2045 = vmatpush.bf16.msra.mxu0 %v1556
    %2046 = vmatpush.bf16.msra.mxu0 %v1548
    %2047 = vmatpush.bf16.msra.mxu0 %v1540
    %2048 = vmatpush.bf16.msra.mxu0 %v1532
    %2049 = vmatpush.bf16.msra.mxu0 %v1524
    %2050 = vmatpush.bf16.msra.mxu0 %v1516
    %2051 = vmatmul.bf16.gmra.mxu0 %v278
    %v2052 = vpop.f32.mrf.mxu0
    %v2053 = vadd.f32 %v2039, %v2052
    %v2054 = vpop.f32.mrf.mxu0
    %v2055 = vadd.f32 %v2041, %v2054
    %2056 = vdwg.mxu0
    %2057 = vmatpush.bf16.msra.mxu0 %v1381
    %2058 = vmatpush.bf16.msra.mxu0 %v1373
    %2059 = vmatpush.bf16.msra.mxu0 %v1365
    %2060 = vmatpush.bf16.msra.mxu0 %v1357
    %2061 = vmatpush.bf16.msra.mxu0 %v1349
    %2062 = vmatpush.bf16.msra.mxu0 %v1341
    %2063 = vmatpush.bf16.msra.mxu0 %v1333
    %2064 = vmatpush.bf16.msra.mxu0 %v1325
    %2065 = vmatmul.bf16.gmra.mxu0 %v275
    %v2066 = vpop.f32.mrf.mxu0
    %v2067 = vadd.f32 %v541, %v2066
    %v2068 = vpop.f32.mrf.mxu0
    %v2069 = vadd.f32 %v541, %v2068
    %2070 = vdwg.mxu0
    %2071 = vmatpush.bf16.msra.mxu0 %v1445
    %2072 = vmatpush.bf16.msra.mxu0 %v1437
    %2073 = vmatpush.bf16.msra.mxu0 %v1429
    %2074 = vmatpush.bf16.msra.mxu0 %v1421
    %2075 = vmatpush.bf16.msra.mxu0 %v1413
    %2076 = vmatpush.bf16.msra.mxu0 %v1405
    %2077 = vmatpush.bf16.msra.mxu0 %v1397
    %2078 = vmatpush.bf16.msra.mxu0 %v1389
    %2079 = vmatmul.bf16.gmra.mxu0 %v276
    %v2080 = vpop.f32.mrf.mxu0
    %v2081 = vadd.f32 %v2067, %v2080
    %v2082 = vpop.f32.mrf.mxu0
    %v2083 = vadd.f32 %v2069, %v2082
    %2084 = vdwg.mxu0
    %2085 = vmatpush.bf16.msra.mxu0 %v1509
    %2086 = vmatpush.bf16.msra.mxu0 %v1501
    %2087 = vmatpush.bf16.msra.mxu0 %v1493
    %2088 = vmatpush.bf16.msra.mxu0 %v1485
    %2089 = vmatpush.bf16.msra.mxu0 %v1477
    %2090 = vmatpush.bf16.msra.mxu0 %v1469
    %2091 = vmatpush.bf16.msra.mxu0 %v1461
    %2092 = vmatpush.bf16.msra.mxu0 %v1453
    %2093 = vmatmul.bf16.gmra.mxu0 %v277
    %v2094 = vpop.f32.mrf.mxu0
    %v2095 = vadd.f32 %v2081, %v2094
    %v2096 = vpop.f32.mrf.mxu0
    %v2097 = vadd.f32 %v2083, %v2096
    %2098 = vdwg.mxu0
    %2099 = vmatpush.bf16.msra.mxu0 %v1573
    %2100 = vmatpush.bf16.msra.mxu0 %v1565
    %2101 = vmatpush.bf16.msra.mxu0 %v1557
    %2102 = vmatpush.bf16.msra.mxu0 %v1549
    %2103 = vmatpush.bf16.msra.mxu0 %v1541
    %2104 = vmatpush.bf16.msra.mxu0 %v1533
    %2105 = vmatpush.bf16.msra.mxu0 %v1525
    %2106 = vmatpush.bf16.msra.mxu0 %v1517
    %2107 = vmatmul.bf16.gmra.mxu0 %v278
    %v2108 = vpop.f32.mrf.mxu0
    %v2109 = vadd.f32 %v2095, %v2108
    %v2110 = vpop.f32.mrf.mxu0
    %v2111 = vadd.f32 %v2097, %v2110
    %2112 = vdwg.mxu0
    %2113 = vmatpush.bf16.msra.mxu0 %v1382
    %2114 = vmatpush.bf16.msra.mxu0 %v1374
    %2115 = vmatpush.bf16.msra.mxu0 %v1366
    %2116 = vmatpush.bf16.msra.mxu0 %v1358
    %2117 = vmatpush.bf16.msra.mxu0 %v1350
    %2118 = vmatpush.bf16.msra.mxu0 %v1342
    %2119 = vmatpush.bf16.msra.mxu0 %v1334
    %2120 = vmatpush.bf16.msra.mxu0 %v1326
    %2121 = vmatmul.bf16.gmra.mxu0 %v275
    %v2122 = vpop.f32.mrf.mxu0
    %v2123 = vadd.f32 %v542, %v2122
    %v2124 = vpop.f32.mrf.mxu0
    %v2125 = vadd.f32 %v542, %v2124
    %2126 = vdwg.mxu0
    %2127 = vmatpush.bf16.msra.mxu0 %v1446
    %2128 = vmatpush.bf16.msra.mxu0 %v1438
    %2129 = vmatpush.bf16.msra.mxu0 %v1430
    %2130 = vmatpush.bf16.msra.mxu0 %v1422
    %2131 = vmatpush.bf16.msra.mxu0 %v1414
    %2132 = vmatpush.bf16.msra.mxu0 %v1406
    %2133 = vmatpush.bf16.msra.mxu0 %v1398
    %2134 = vmatpush.bf16.msra.mxu0 %v1390
    %2135 = vmatmul.bf16.gmra.mxu0 %v276
    %v2136 = vpop.f32.mrf.mxu0
    %v2137 = vadd.f32 %v2123, %v2136
    %v2138 = vpop.f32.mrf.mxu0
    %v2139 = vadd.f32 %v2125, %v2138
    %2140 = vdwg.mxu0
    %2141 = vmatpush.bf16.msra.mxu0 %v1510
    %2142 = vmatpush.bf16.msra.mxu0 %v1502
    %2143 = vmatpush.bf16.msra.mxu0 %v1494
    %2144 = vmatpush.bf16.msra.mxu0 %v1486
    %2145 = vmatpush.bf16.msra.mxu0 %v1478
    %2146 = vmatpush.bf16.msra.mxu0 %v1470
    %2147 = vmatpush.bf16.msra.mxu0 %v1462
    %2148 = vmatpush.bf16.msra.mxu0 %v1454
    %2149 = vmatmul.bf16.gmra.mxu0 %v277
    %v2150 = vpop.f32.mrf.mxu0
    %v2151 = vadd.f32 %v2137, %v2150
    %v2152 = vpop.f32.mrf.mxu0
    %v2153 = vadd.f32 %v2139, %v2152
    %2154 = vdwg.mxu0
    %2155 = vmatpush.bf16.msra.mxu0 %v1574
    %2156 = vmatpush.bf16.msra.mxu0 %v1566
    %2157 = vmatpush.bf16.msra.mxu0 %v1558
    %2158 = vmatpush.bf16.msra.mxu0 %v1550
    %2159 = vmatpush.bf16.msra.mxu0 %v1542
    %2160 = vmatpush.bf16.msra.mxu0 %v1534
    %2161 = vmatpush.bf16.msra.mxu0 %v1526
    %2162 = vmatpush.bf16.msra.mxu0 %v1518
    %2163 = vmatmul.bf16.gmra.mxu0 %v278
    %v2164 = vpop.f32.mrf.mxu0
    %v2165 = vadd.f32 %v2151, %v2164
    %v2166 = vpop.f32.mrf.mxu0
    %v2167 = vadd.f32 %v2153, %v2166
    %2168 = vdwg.mxu0
    %2169 = vmatpush.bf16.msra.mxu0 %v1383
    %2170 = vmatpush.bf16.msra.mxu0 %v1375
    %2171 = vmatpush.bf16.msra.mxu0 %v1367
    %2172 = vmatpush.bf16.msra.mxu0 %v1359
    %2173 = vmatpush.bf16.msra.mxu0 %v1351
    %2174 = vmatpush.bf16.msra.mxu0 %v1343
    %2175 = vmatpush.bf16.msra.mxu0 %v1335
    %2176 = vmatpush.bf16.msra.mxu0 %v1327
    %2177 = vmatmul.bf16.gmra.mxu0 %v275
    %v2178 = vpop.f32.mrf.mxu0
    %v2179 = vadd.f32 %v543, %v2178
    %v2180 = vpop.f32.mrf.mxu0
    %v2181 = vadd.f32 %v543, %v2180
    %2182 = vdwg.mxu0
    %2183 = vmatpush.bf16.msra.mxu0 %v1447
    %2184 = vmatpush.bf16.msra.mxu0 %v1439
    %2185 = vmatpush.bf16.msra.mxu0 %v1431
    %2186 = vmatpush.bf16.msra.mxu0 %v1423
    %2187 = vmatpush.bf16.msra.mxu0 %v1415
    %2188 = vmatpush.bf16.msra.mxu0 %v1407
    %2189 = vmatpush.bf16.msra.mxu0 %v1399
    %2190 = vmatpush.bf16.msra.mxu0 %v1391
    %2191 = vmatmul.bf16.gmra.mxu0 %v276
    %v2192 = vpop.f32.mrf.mxu0
    %v2193 = vadd.f32 %v2179, %v2192
    %v2194 = vpop.f32.mrf.mxu0
    %v2195 = vadd.f32 %v2181, %v2194
    %2196 = vdwg.mxu0
    %2197 = vmatpush.bf16.msra.mxu0 %v1511
    %2198 = vmatpush.bf16.msra.mxu0 %v1503
    %2199 = vmatpush.bf16.msra.mxu0 %v1495
    %2200 = vmatpush.bf16.msra.mxu0 %v1487
    %2201 = vmatpush.bf16.msra.mxu0 %v1479
    %2202 = vmatpush.bf16.msra.mxu0 %v1471
    %2203 = vmatpush.bf16.msra.mxu0 %v1463
    %2204 = vmatpush.bf16.msra.mxu0 %v1455
    %2205 = vmatmul.bf16.gmra.mxu0 %v277
    %v2206 = vpop.f32.mrf.mxu0
    %v2207 = vadd.f32 %v2193, %v2206
    %v2208 = vpop.f32.mrf.mxu0
    %v2209 = vadd.f32 %v2195, %v2208
    %2210 = vdwg.mxu0
    %2211 = vmatpush.bf16.msra.mxu0 %v1575
    %2212 = vmatpush.bf16.msra.mxu0 %v1567
    %2213 = vmatpush.bf16.msra.mxu0 %v1559
    %2214 = vmatpush.bf16.msra.mxu0 %v1551
    %2215 = vmatpush.bf16.msra.mxu0 %v1543
    %2216 = vmatpush.bf16.msra.mxu0 %v1535
    %2217 = vmatpush.bf16.msra.mxu0 %v1527
    %2218 = vmatpush.bf16.msra.mxu0 %v1519
    %2219 = vmatmul.bf16.gmra.mxu0 %v278
    %v2220 = vpop.f32.mrf.mxu0
    %v2221 = vadd.f32 %v2207, %v2220
    %v2222 = vpop.f32.mrf.mxu0
    %v2223 = vadd.f32 %v2209, %v2222
    %2224 = vdwg.mxu0
    %2225 = vmatpush.bf16.msra.mxu0 %v1384
    %2226 = vmatpush.bf16.msra.mxu0 %v1376
    %2227 = vmatpush.bf16.msra.mxu0 %v1368
    %2228 = vmatpush.bf16.msra.mxu0 %v1360
    %2229 = vmatpush.bf16.msra.mxu0 %v1352
    %2230 = vmatpush.bf16.msra.mxu0 %v1344
    %2231 = vmatpush.bf16.msra.mxu0 %v1336
    %2232 = vmatpush.bf16.msra.mxu0 %v1328
    %2233 = vmatmul.bf16.gmra.mxu0 %v275
    %v2234 = vpop.f32.mrf.mxu0
    %v2235 = vadd.f32 %v544, %v2234
    %v2236 = vpop.f32.mrf.mxu0
    %v2237 = vadd.f32 %v544, %v2236
    %2238 = vdwg.mxu0
    %2239 = vmatpush.bf16.msra.mxu0 %v1448
    %2240 = vmatpush.bf16.msra.mxu0 %v1440
    %2241 = vmatpush.bf16.msra.mxu0 %v1432
    %2242 = vmatpush.bf16.msra.mxu0 %v1424
    %2243 = vmatpush.bf16.msra.mxu0 %v1416
    %2244 = vmatpush.bf16.msra.mxu0 %v1408
    %2245 = vmatpush.bf16.msra.mxu0 %v1400
    %2246 = vmatpush.bf16.msra.mxu0 %v1392
    %2247 = vmatmul.bf16.gmra.mxu0 %v276
    %v2248 = vpop.f32.mrf.mxu0
    %v2249 = vadd.f32 %v2235, %v2248
    %v2250 = vpop.f32.mrf.mxu0
    %v2251 = vadd.f32 %v2237, %v2250
    %2252 = vdwg.mxu0
    %2253 = vmatpush.bf16.msra.mxu0 %v1512
    %2254 = vmatpush.bf16.msra.mxu0 %v1504
    %2255 = vmatpush.bf16.msra.mxu0 %v1496
    %2256 = vmatpush.bf16.msra.mxu0 %v1488
    %2257 = vmatpush.bf16.msra.mxu0 %v1480
    %2258 = vmatpush.bf16.msra.mxu0 %v1472
    %2259 = vmatpush.bf16.msra.mxu0 %v1464
    %2260 = vmatpush.bf16.msra.mxu0 %v1456
    %2261 = vmatmul.bf16.gmra.mxu0 %v277
    %v2262 = vpop.f32.mrf.mxu0
    %v2263 = vadd.f32 %v2249, %v2262
    %v2264 = vpop.f32.mrf.mxu0
    %v2265 = vadd.f32 %v2251, %v2264
    %2266 = vdwg.mxu0
    %2267 = vmatpush.bf16.msra.mxu0 %v1576
    %2268 = vmatpush.bf16.msra.mxu0 %v1568
    %2269 = vmatpush.bf16.msra.mxu0 %v1560
    %2270 = vmatpush.bf16.msra.mxu0 %v1552
    %2271 = vmatpush.bf16.msra.mxu0 %v1544
    %2272 = vmatpush.bf16.msra.mxu0 %v1536
    %2273 = vmatpush.bf16.msra.mxu0 %v1528
    %2274 = vmatpush.bf16.msra.mxu0 %v1520
    %2275 = vmatmul.bf16.gmra.mxu0 %v278
    %v2276 = vpop.f32.mrf.mxu0
    %v2277 = vadd.f32 %v2263, %v2276
    %v2278 = vpop.f32.mrf.mxu0
    %v2279 = vadd.f32 %v2265, %v2278
    %2280 = vdwg.mxu0
    %v2281 = vmax.f32 %v1885, 0.0
    %v2282 = vmax.f32 %v1941, 0.0
    %v2283 = vmax.f32 %v1997, 0.0
    %v2284 = vmax.f32 %v2053, 0.0
    %v2285 = vmax.f32 %v2109, 0.0
    %v2286 = vmax.f32 %v2165, 0.0
    %v2287 = vmax.f32 %v2221, 0.0
    %v2288 = vmax.f32 %v2277, 0.0
    %v2289 = vmax.f32 %v1887, 0.0
    %v2290 = vmax.f32 %v1943, 0.0
    %v2291 = vmax.f32 %v1999, 0.0
    %v2292 = vmax.f32 %v2055, 0.0
    %v2293 = vmax.f32 %v2111, 0.0
    %v2294 = vmax.f32 %v2167, 0.0
    %v2295 = vmax.f32 %v2223, 0.0
    %v2296 = vmax.f32 %v2279, 0.0
    %v2297 = vpack.c.bf16 %v2289, %v2281
    %v2298 = vpack.c.bf16 %v2290, %v2282
    %v2299 = vpack.c.bf16 %v2291, %v2283
    %v2300 = vpack.c.bf16 %v2292, %v2284
    %v2301 = vpack.c.bf16 %v2293, %v2285
    %v2302 = vpack.c.bf16 %v2294, %v2286
    %v2303 = vpack.c.bf16 %v2295, %v2287
    %v2304 = vpack.c.bf16 %v2296, %v2288
    %v2305 = vld [vmem:[#allocation11] sm:$0xf]
    %v2306 = vld [vmem:[#allocation11 + $0x4] sm:$0xf]
    %v2307 = vld [vmem:[#allocation11 + $0x8] sm:$0xf]
    %v2308 = vld [vmem:[#allocation11 + $0xc] sm:$0xf]
    %v2309 = vld [vmem:[#allocation11 + $0x10] sm:$0xf]
    %v2310 = vld [vmem:[#allocation11 + $0x14] sm:$0xf]
    %v2311 = vld [vmem:[#allocation11 + $0x18] sm:$0xf]
    %v2312 = vld [vmem:[#allocation11 + $0x1c] sm:$0xf]
    %v2313 = vld [vmem:[#allocation11 + $0x20] sm:$0xf]
    %v2314 = vld [vmem:[#allocation11 + $0x24] sm:$0xf]
    %v2315 = vld [vmem:[#allocation11 + $0x28] sm:$0xf]
    %v2316 = vld [vmem:[#allocation11 + $0x2c] sm:$0xf]
    %v2317 = vld [vmem:[#allocation11 + $0x30] sm:$0xf]
    %v2318 = vld [vmem:[#allocation11 + $0x34] sm:$0xf]
    %v2319 = vld [vmem:[#allocation11 + $0x38] sm:$0xf]
    %v2320 = vld [vmem:[#allocation11 + $0x3c] sm:$0xf]
    %v2321 = vld [vmem:[#allocation11 + $0x40] sm:$0xf]
    %v2322 = vld [vmem:[#allocation11 + $0x44] sm:$0xf]
    %v2323 = vld [vmem:[#allocation11 + $0x48] sm:$0xf]
    %v2324 = vld [vmem:[#allocation11 + $0x4c] sm:$0xf]
    %v2325 = vld [vmem:[#allocation11 + $0x50] sm:$0xf]
    %v2326 = vld [vmem:[#allocation11 + $0x54] sm:$0xf]
    %v2327 = vld [vmem:[#allocation11 + $0x58] sm:$0xf]
    %v2328 = vld [vmem:[#allocation11 + $0x5c] sm:$0xf]
    %v2329 = vld [vmem:[#allocation11 + $0x60] sm:$0xf]
    %v2330 = vld [vmem:[#allocation11 + $0x64] sm:$0xf]
    %v2331 = vld [vmem:[#allocation11 + $0x68] sm:$0xf]
    %v2332 = vld [vmem:[#allocation11 + $0x6c] sm:$0xf]
    %v2333 = vld [vmem:[#allocation11 + $0x70] sm:$0xf]
    %v2334 = vld [vmem:[#allocation11 + $0x74] sm:$0xf]
    %v2335 = vld [vmem:[#allocation11 + $0x78] sm:$0xf]
    %v2336 = vld [vmem:[#allocation11 + $0x7c] sm:$0xf]
    %v2337 = vld [vmem:[#allocation11 + $0x80] sm:$0xf]
    %v2338 = vld [vmem:[#allocation11 + $0x84] sm:$0xf]
    %v2339 = vld [vmem:[#allocation11 + $0x88] sm:$0xf]
    %v2340 = vld [vmem:[#allocation11 + $0x8c] sm:$0xf]
    %v2341 = vld [vmem:[#allocation11 + $0x90] sm:$0xf]
    %v2342 = vld [vmem:[#allocation11 + $0x94] sm:$0xf]
    %v2343 = vld [vmem:[#allocation11 + $0x98] sm:$0xf]
    %v2344 = vld [vmem:[#allocation11 + $0x9c] sm:$0xf]
    %v2345 = vld [vmem:[#allocation11 + $0xa0] sm:$0xf]
    %v2346 = vld [vmem:[#allocation11 + $0xa4] sm:$0xf]
    %v2347 = vld [vmem:[#allocation11 + $0xa8] sm:$0xf]
    %v2348 = vld [vmem:[#allocation11 + $0xac] sm:$0xf]
    %v2349 = vld [vmem:[#allocation11 + $0xb0] sm:$0xf]
    %v2350 = vld [vmem:[#allocation11 + $0xb4] sm:$0xf]
    %v2351 = vld [vmem:[#allocation11 + $0xb8] sm:$0xf]
    %v2352 = vld [vmem:[#allocation11 + $0xbc] sm:$0xf]
    %v2353 = vld [vmem:[#allocation11 + $0xc0] sm:$0xf]
    %v2354 = vld [vmem:[#allocation11 + $0xc4] sm:$0xf]
    %v2355 = vld [vmem:[#allocation11 + $0xc8] sm:$0xf]
    %v2356 = vld [vmem:[#allocation11 + $0xcc] sm:$0xf]
    %v2357 = vld [vmem:[#allocation11 + $0xd0] sm:$0xf]
    %v2358 = vld [vmem:[#allocation11 + $0xd4] sm:$0xf]
    %v2359 = vld [vmem:[#allocation11 + $0xd8] sm:$0xf]
    %v2360 = vld [vmem:[#allocation11 + $0xdc] sm:$0xf]
    %v2361 = vld [vmem:[#allocation11 + $0xe0] sm:$0xf]
    %v2362 = vld [vmem:[#allocation11 + $0xe4] sm:$0xf]
    %v2363 = vld [vmem:[#allocation11 + $0xe8] sm:$0xf]
    %v2364 = vld [vmem:[#allocation11 + $0xec] sm:$0xf]
    %v2365 = vld [vmem:[#allocation11 + $0xf0] sm:$0xf]
    %v2366 = vld [vmem:[#allocation11 + $0xf4] sm:$0xf]
    %v2367 = vld [vmem:[#allocation11 + $0xf8] sm:$0xf]
    %v2368 = vld [vmem:[#allocation11 + $0xfc] sm:$0xf]
    %v2369 = vld [vmem:[#allocation11 + $0x100] sm:$0xf]
    %v2370 = vld [vmem:[#allocation11 + $0x104] sm:$0xf]
    %v2371 = vld [vmem:[#allocation11 + $0x108] sm:$0xf]
    %v2372 = vld [vmem:[#allocation11 + $0x10c] sm:$0xf]
    %v2373 = vld [vmem:[#allocation11 + $0x110] sm:$0xf]
    %v2374 = vld [vmem:[#allocation11 + $0x114] sm:$0xf]
    %v2375 = vld [vmem:[#allocation11 + $0x118] sm:$0xf]
    %v2376 = vld [vmem:[#allocation11 + $0x11c] sm:$0xf]
    %v2377 = vld [vmem:[#allocation11 + $0x120] sm:$0xf]
    %v2378 = vld [vmem:[#allocation11 + $0x124] sm:$0xf]
    %v2379 = vld [vmem:[#allocation11 + $0x128] sm:$0xf]
    %v2380 = vld [vmem:[#allocation11 + $0x12c] sm:$0xf]
    %v2381 = vld [vmem:[#allocation11 + $0x130] sm:$0xf]
    %v2382 = vld [vmem:[#allocation11 + $0x134] sm:$0xf]
    %v2383 = vld [vmem:[#allocation11 + $0x138] sm:$0xf]
    %v2384 = vld [vmem:[#allocation11 + $0x13c] sm:$0xf]
    %v2385 = vld [vmem:[#allocation11 + $0x140] sm:$0xf]
    %v2386 = vld [vmem:[#allocation11 + $0x144] sm:$0xf]
    %v2387 = vld [vmem:[#allocation11 + $0x148] sm:$0xf]
    %v2388 = vld [vmem:[#allocation11 + $0x14c] sm:$0xf]
    %v2389 = vld [vmem:[#allocation11 + $0x150] sm:$0xf]
    %v2390 = vld [vmem:[#allocation11 + $0x154] sm:$0xf]
    %v2391 = vld [vmem:[#allocation11 + $0x158] sm:$0xf]
    %v2392 = vld [vmem:[#allocation11 + $0x15c] sm:$0xf]
    %v2393 = vld [vmem:[#allocation11 + $0x160] sm:$0xf]
    %v2394 = vld [vmem:[#allocation11 + $0x164] sm:$0xf]
    %v2395 = vld [vmem:[#allocation11 + $0x168] sm:$0xf]
    %v2396 = vld [vmem:[#allocation11 + $0x16c] sm:$0xf]
    %v2397 = vld [vmem:[#allocation11 + $0x170] sm:$0xf]
    %v2398 = vld [vmem:[#allocation11 + $0x174] sm:$0xf]
    %v2399 = vld [vmem:[#allocation11 + $0x178] sm:$0xf]
    %v2400 = vld [vmem:[#allocation11 + $0x17c] sm:$0xf]
    %v2401 = vld [vmem:[#allocation11 + $0x180] sm:$0xf]
    %v2402 = vld [vmem:[#allocation11 + $0x184] sm:$0xf]
    %v2403 = vld [vmem:[#allocation11 + $0x188] sm:$0xf]
    %v2404 = vld [vmem:[#allocation11 + $0x18c] sm:$0xf]
    %v2405 = vld [vmem:[#allocation11 + $0x190] sm:$0xf]
    %v2406 = vld [vmem:[#allocation11 + $0x194] sm:$0xf]
    %v2407 = vld [vmem:[#allocation11 + $0x198] sm:$0xf]
    %v2408 = vld [vmem:[#allocation11 + $0x19c] sm:$0xf]
    %v2409 = vld [vmem:[#allocation11 + $0x1a0] sm:$0xf]
    %v2410 = vld [vmem:[#allocation11 + $0x1a4] sm:$0xf]
    %v2411 = vld [vmem:[#allocation11 + $0x1a8] sm:$0xf]
    %v2412 = vld [vmem:[#allocation11 + $0x1ac] sm:$0xf]
    %v2413 = vld [vmem:[#allocation11 + $0x1b0] sm:$0xf]
    %v2414 = vld [vmem:[#allocation11 + $0x1b4] sm:$0xf]
    %v2415 = vld [vmem:[#allocation11 + $0x1b8] sm:$0xf]
    %v2416 = vld [vmem:[#allocation11 + $0x1bc] sm:$0xf]
    %v2417 = vld [vmem:[#allocation11 + $0x1c0] sm:$0xf]
    %v2418 = vld [vmem:[#allocation11 + $0x1c4] sm:$0xf]
    %v2419 = vld [vmem:[#allocation11 + $0x1c8] sm:$0xf]
    %v2420 = vld [vmem:[#allocation11 + $0x1cc] sm:$0xf]
    %v2421 = vld [vmem:[#allocation11 + $0x1d0] sm:$0xf]
    %v2422 = vld [vmem:[#allocation11 + $0x1d4] sm:$0xf]
    %v2423 = vld [vmem:[#allocation11 + $0x1d8] sm:$0xf]
    %v2424 = vld [vmem:[#allocation11 + $0x1dc] sm:$0xf]
    %v2425 = vld [vmem:[#allocation11 + $0x1e0] sm:$0xf]
    %v2426 = vld [vmem:[#allocation11 + $0x1e4] sm:$0xf]
    %v2427 = vld [vmem:[#allocation11 + $0x1e8] sm:$0xf]
    %v2428 = vld [vmem:[#allocation11 + $0x1ec] sm:$0xf]
    %v2429 = vld [vmem:[#allocation11 + $0x1f0] sm:$0xf]
    %v2430 = vld [vmem:[#allocation11 + $0x1f4] sm:$0xf]
    %v2431 = vld [vmem:[#allocation11 + $0x1f8] sm:$0xf]
    %v2432 = vld [vmem:[#allocation11 + $0x1fc] sm:$0xf]
    %v2433 = vld [vmem:[%s6] sm:$0x1]
    %v2435 = vperm.slane %v2433, 0
    %v2565 = vunpack.c.l.b16 %v2305
    %v2566 = vunpack.c.l.b16 %v2306
    %v2567 = vunpack.c.l.b16 %v2307
    %v2568 = vunpack.c.l.b16 %v2308
    %v2569 = vunpack.c.l.b16 %v2309
    %v2570 = vunpack.c.l.b16 %v2310
    %v2571 = vunpack.c.l.b16 %v2311
    %v2572 = vunpack.c.l.b16 %v2312
    %v2573 = vunpack.c.l.b16 %v2313
    %v2574 = vunpack.c.l.b16 %v2314
    %v2575 = vunpack.c.l.b16 %v2315
    %v2576 = vunpack.c.l.b16 %v2316
    %v2577 = vunpack.c.l.b16 %v2317
    %v2578 = vunpack.c.l.b16 %v2318
    %v2579 = vunpack.c.l.b16 %v2319
    %v2580 = vunpack.c.l.b16 %v2320
    %v2581 = vunpack.c.l.b16 %v2321
    %v2582 = vunpack.c.l.b16 %v2322
    %v2583 = vunpack.c.l.b16 %v2323
    %v2584 = vunpack.c.l.b16 %v2324
    %v2585 = vunpack.c.l.b16 %v2325
    %v2586 = vunpack.c.l.b16 %v2326
    %v2587 = vunpack.c.l.b16 %v2327
    %v2588 = vunpack.c.l.b16 %v2328
    %v2589 = vunpack.c.l.b16 %v2329
    %v2590 = vunpack.c.l.b16 %v2330
    %v2591 = vunpack.c.l.b16 %v2331
    %v2592 = vunpack.c.l.b16 %v2332
    %v2593 = vunpack.c.l.b16 %v2333
    %v2594 = vunpack.c.l.b16 %v2334
    %v2595 = vunpack.c.l.b16 %v2335
    %v2596 = vunpack.c.l.b16 %v2336
    %v2597 = vunpack.c.l.b16 %v2337
    %v2598 = vunpack.c.l.b16 %v2338
    %v2599 = vunpack.c.l.b16 %v2339
    %v2600 = vunpack.c.l.b16 %v2340
    %v2601 = vunpack.c.l.b16 %v2341
    %v2602 = vunpack.c.l.b16 %v2342
    %v2603 = vunpack.c.l.b16 %v2343
    %v2604 = vunpack.c.l.b16 %v2344
    %v2605 = vunpack.c.l.b16 %v2345
    %v2606 = vunpack.c.l.b16 %v2346
    %v2607 = vunpack.c.l.b16 %v2347
    %v2608 = vunpack.c.l.b16 %v2348
    %v2609 = vunpack.c.l.b16 %v2349
    %v2610 = vunpack.c.l.b16 %v2350
    %v2611 = vunpack.c.l.b16 %v2351
    %v2612 = vunpack.c.l.b16 %v2352
    %v2613 = vunpack.c.l.b16 %v2353
    %v2614 = vunpack.c.l.b16 %v2354
    %v2615 = vunpack.c.l.b16 %v2355
    %v2616 = vunpack.c.l.b16 %v2356
    %v2617 = vunpack.c.l.b16 %v2357
    %v2618 = vunpack.c.l.b16 %v2358
    %v2619 = vunpack.c.l.b16 %v2359
    %v2620 = vunpack.c.l.b16 %v2360
    %v2621 = vunpack.c.l.b16 %v2361
    %v2622 = vunpack.c.l.b16 %v2362
    %v2623 = vunpack.c.l.b16 %v2363
    %v2624 = vunpack.c.l.b16 %v2364
    %v2625 = vunpack.c.l.b16 %v2365
    %v2626 = vunpack.c.l.b16 %v2366
    %v2627 = vunpack.c.l.b16 %v2367
    %v2628 = vunpack.c.l.b16 %v2368
    %v2629 = vunpack.c.l.b16 %v2369
    %v2630 = vunpack.c.l.b16 %v2370
    %v2631 = vunpack.c.l.b16 %v2371
    %v2632 = vunpack.c.l.b16 %v2372
    %v2633 = vunpack.c.l.b16 %v2373
    %v2634 = vunpack.c.l.b16 %v2374
    %v2635 = vunpack.c.l.b16 %v2375
    %v2636 = vunpack.c.l.b16 %v2376
    %v2637 = vunpack.c.l.b16 %v2377
    %v2638 = vunpack.c.l.b16 %v2378
    %v2639 = vunpack.c.l.b16 %v2379
    %v2640 = vunpack.c.l.b16 %v2380
    %v2641 = vunpack.c.l.b16 %v2381
    %v2642 = vunpack.c.l.b16 %v2382
    %v2643 = vunpack.c.l.b16 %v2383
    %v2644 = vunpack.c.l.b16 %v2384
    %v2645 = vunpack.c.l.b16 %v2385
    %v2646 = vunpack.c.l.b16 %v2386
    %v2647 = vunpack.c.l.b16 %v2387
    %v2648 = vunpack.c.l.b16 %v2388
    %v2649 = vunpack.c.l.b16 %v2389
    %v2650 = vunpack.c.l.b16 %v2390
    %v2651 = vunpack.c.l.b16 %v2391
    %v2652 = vunpack.c.l.b16 %v2392
    %v2653 = vunpack.c.l.b16 %v2393
    %v2654 = vunpack.c.l.b16 %v2394
    %v2655 = vunpack.c.l.b16 %v2395
    %v2656 = vunpack.c.l.b16 %v2396
    %v2657 = vunpack.c.l.b16 %v2397
    %v2658 = vunpack.c.l.b16 %v2398
    %v2659 = vunpack.c.l.b16 %v2399
    %v2660 = vunpack.c.l.b16 %v2400
    %v2661 = vunpack.c.l.b16 %v2401
    %v2662 = vunpack.c.l.b16 %v2402
    %v2663 = vunpack.c.l.b16 %v2403
    %v2664 = vunpack.c.l.b16 %v2404
    %v2665 = vunpack.c.l.b16 %v2405
    %v2666 = vunpack.c.l.b16 %v2406
    %v2667 = vunpack.c.l.b16 %v2407
    %v2668 = vunpack.c.l.b16 %v2408
    %v2669 = vunpack.c.l.b16 %v2409
    %v2670 = vunpack.c.l.b16 %v2410
    %v2671 = vunpack.c.l.b16 %v2411
    %v2672 = vunpack.c.l.b16 %v2412
    %v2673 = vunpack.c.l.b16 %v2413
    %v2674 = vunpack.c.l.b16 %v2414
    %v2675 = vunpack.c.l.b16 %v2415
    %v2676 = vunpack.c.l.b16 %v2416
    %v2677 = vunpack.c.l.b16 %v2417
    %v2678 = vunpack.c.l.b16 %v2418
    %v2679 = vunpack.c.l.b16 %v2419
    %v2680 = vunpack.c.l.b16 %v2420
    %v2681 = vunpack.c.l.b16 %v2421
    %v2682 = vunpack.c.l.b16 %v2422
    %v2683 = vunpack.c.l.b16 %v2423
    %v2684 = vunpack.c.l.b16 %v2424
    %v2685 = vunpack.c.l.b16 %v2425
    %v2686 = vunpack.c.l.b16 %v2426
    %v2687 = vunpack.c.l.b16 %v2427
    %v2688 = vunpack.c.l.b16 %v2428
    %v2689 = vunpack.c.l.b16 %v2429
    %v2690 = vunpack.c.l.b16 %v2430
    %v2691 = vunpack.c.l.b16 %v2431
    %v2692 = vunpack.c.l.b16 %v2432
    %v2693 = vpack.c.b16 %v2566, %v2565
    %v2694 = vpack.c.b16 %v2568, %v2567
    %v2695 = vpack.c.b16 %v2570, %v2569
    %v2696 = vpack.c.b16 %v2572, %v2571
    %v2697 = vpack.c.b16 %v2574, %v2573
    %v2698 = vpack.c.b16 %v2576, %v2575
    %v2699 = vpack.c.b16 %v2578, %v2577
    %v2700 = vpack.c.b16 %v2580, %v2579
    %v2701 = vpack.c.b16 %v2582, %v2581
    %v2702 = vpack.c.b16 %v2584, %v2583
    %v2703 = vpack.c.b16 %v2586, %v2585
    %v2704 = vpack.c.b16 %v2588, %v2587
    %v2705 = vpack.c.b16 %v2590, %v2589
    %v2706 = vpack.c.b16 %v2592, %v2591
    %v2707 = vpack.c.b16 %v2594, %v2593
    %v2708 = vpack.c.b16 %v2596, %v2595
    %v2709 = vpack.c.b16 %v2598, %v2597
    %v2710 = vpack.c.b16 %v2600, %v2599
    %v2711 = vpack.c.b16 %v2602, %v2601
    %v2712 = vpack.c.b16 %v2604, %v2603
    %v2713 = vpack.c.b16 %v2606, %v2605
    %v2714 = vpack.c.b16 %v2608, %v2607
    %v2715 = vpack.c.b16 %v2610, %v2609
    %v2716 = vpack.c.b16 %v2612, %v2611
    %v2717 = vpack.c.b16 %v2614, %v2613
    %v2718 = vpack.c.b16 %v2616, %v2615
    %v2719 = vpack.c.b16 %v2618, %v2617
    %v2720 = vpack.c.b16 %v2620, %v2619
    %v2721 = vpack.c.b16 %v2622, %v2621
    %v2722 = vpack.c.b16 %v2624, %v2623
    %v2723 = vpack.c.b16 %v2626, %v2625
    %v2724 = vpack.c.b16 %v2628, %v2627
    %v2725 = vpack.c.b16 %v2630, %v2629
    %v2726 = vpack.c.b16 %v2632, %v2631
    %v2727 = vpack.c.b16 %v2634, %v2633
    %v2728 = vpack.c.b16 %v2636, %v2635
    %v2729 = vpack.c.b16 %v2638, %v2637
    %v2730 = vpack.c.b16 %v2640, %v2639
    %v2731 = vpack.c.b16 %v2642, %v2641
    %v2732 = vpack.c.b16 %v2644, %v2643
    %v2733 = vpack.c.b16 %v2646, %v2645
    %v2734 = vpack.c.b16 %v2648, %v2647
    %v2735 = vpack.c.b16 %v2650, %v2649
    %v2736 = vpack.c.b16 %v2652, %v2651
    %v2737 = vpack.c.b16 %v2654, %v2653
    %v2738 = vpack.c.b16 %v2656, %v2655
    %v2739 = vpack.c.b16 %v2658, %v2657
    %v2740 = vpack.c.b16 %v2660, %v2659
    %v2741 = vpack.c.b16 %v2662, %v2661
    %v2742 = vpack.c.b16 %v2664, %v2663
    %v2743 = vpack.c.b16 %v2666, %v2665
    %v2744 = vpack.c.b16 %v2668, %v2667
    %v2745 = vpack.c.b16 %v2670, %v2669
    %v2746 = vpack.c.b16 %v2672, %v2671
    %v2747 = vpack.c.b16 %v2674, %v2673
    %v2748 = vpack.c.b16 %v2676, %v2675
    %v2749 = vpack.c.b16 %v2678, %v2677
    %v2750 = vpack.c.b16 %v2680, %v2679
    %v2751 = vpack.c.b16 %v2682, %v2681
    %v2752 = vpack.c.b16 %v2684, %v2683
    %v2753 = vpack.c.b16 %v2686, %v2685
    %v2754 = vpack.c.b16 %v2688, %v2687
    %v2755 = vpack.c.b16 %v2690, %v2689
    %v2756 = vpack.c.b16 %v2692, %v2691
    %2821 = vmatpush.bf16.msra.mxu0 %v2700
    %2822 = vmatpush.bf16.msra.mxu0 %v2699
    %2823 = vmatpush.bf16.msra.mxu0 %v2698
    %2824 = vmatpush.bf16.msra.mxu0 %v2697
    %2825 = vmatpush.bf16.msra.mxu0 %v2696
    %2826 = vmatpush.bf16.msra.mxu0 %v2695
    %2827 = vmatpush.bf16.msra.mxu0 %v2694
    %2828 = vmatpush.bf16.msra.mxu0 %v2693
    %2829 = vmatmul.bf16.gmra.mxu0 %v2297
    %v2830 = vpop.f32.mrf.mxu0
    %v2831 = vadd.f32 %v2435, %v2830
    %v2832 = vpop.f32.mrf.mxu0
    %v2833 = vadd.f32 %v2435, %v2832
    %2834 = vdwg.mxu0
    %2835 = vmatpush.bf16.msra.mxu0 %v2708
    %2836 = vmatpush.bf16.msra.mxu0 %v2707
    %2837 = vmatpush.bf16.msra.mxu0 %v2706
    %2838 = vmatpush.bf16.msra.mxu0 %v2705
    %2839 = vmatpush.bf16.msra.mxu0 %v2704
    %2840 = vmatpush.bf16.msra.mxu0 %v2703
    %2841 = vmatpush.bf16.msra.mxu0 %v2702
    %2842 = vmatpush.bf16.msra.mxu0 %v2701
    %2843 = vmatmul.bf16.gmra.mxu0 %v2298
    %v2844 = vpop.f32.mrf.mxu0
    %v2845 = vadd.f32 %v2831, %v2844
    %v2846 = vpop.f32.mrf.mxu0
    %v2847 = vadd.f32 %v2833, %v2846
    %2848 = vdwg.mxu0
    %2849 = vmatpush.bf16.msra.mxu0 %v2716
    %2850 = vmatpush.bf16.msra.mxu0 %v2715
    %2851 = vmatpush.bf16.msra.mxu0 %v2714
    %2852 = vmatpush.bf16.msra.mxu0 %v2713
    %2853 = vmatpush.bf16.msra.mxu0 %v2712
    %2854 = vmatpush.bf16.msra.mxu0 %v2711
    %2855 = vmatpush.bf16.msra.mxu0 %v2710
    %2856 = vmatpush.bf16.msra.mxu0 %v2709
    %2857 = vmatmul.bf16.gmra.mxu0 %v2299
    %v2858 = vpop.f32.mrf.mxu0
    %v2859 = vadd.f32 %v2845, %v2858
    %v2860 = vpop.f32.mrf.mxu0
    %v2861 = vadd.f32 %v2847, %v2860
    %2862 = vdwg.mxu0
    %2863 = vmatpush.bf16.msra.mxu0 %v2724
    %2864 = vmatpush.bf16.msra.mxu0 %v2723
    %2865 = vmatpush.bf16.msra.mxu0 %v2722
    %2866 = vmatpush.bf16.msra.mxu0 %v2721
    %2867 = vmatpush.bf16.msra.mxu0 %v2720
    %2868 = vmatpush.bf16.msra.mxu0 %v2719
    %2869 = vmatpush.bf16.msra.mxu0 %v2718
    %2870 = vmatpush.bf16.msra.mxu0 %v2717
    %2871 = vmatmul.bf16.gmra.mxu0 %v2300
    %v2872 = vpop.f32.mrf.mxu0
    %v2873 = vadd.f32 %v2859, %v2872
    %v2874 = vpop.f32.mrf.mxu0
    %v2875 = vadd.f32 %v2861, %v2874
    %2876 = vdwg.mxu0
    %2877 = vmatpush.bf16.msra.mxu0 %v2732
    %2878 = vmatpush.bf16.msra.mxu0 %v2731
    %2879 = vmatpush.bf16.msra.mxu0 %v2730
    %2880 = vmatpush.bf16.msra.mxu0 %v2729
    %2881 = vmatpush.bf16.msra.mxu0 %v2728
    %2882 = vmatpush.bf16.msra.mxu0 %v2727
    %2883 = vmatpush.bf16.msra.mxu0 %v2726
    %2884 = vmatpush.bf16.msra.mxu0 %v2725
    %2885 = vmatmul.bf16.gmra.mxu0 %v2301
    %v2886 = vpop.f32.mrf.mxu0
    %v2887 = vadd.f32 %v2873, %v2886
    %v2888 = vpop.f32.mrf.mxu0
    %v2889 = vadd.f32 %v2875, %v2888
    %2890 = vdwg.mxu0
    %2891 = vmatpush.bf16.msra.mxu0 %v2740
    %2892 = vmatpush.bf16.msra.mxu0 %v2739
    %2893 = vmatpush.bf16.msra.mxu0 %v2738
    %2894 = vmatpush.bf16.msra.mxu0 %v2737
    %2895 = vmatpush.bf16.msra.mxu0 %v2736
    %2896 = vmatpush.bf16.msra.mxu0 %v2735
    %2897 = vmatpush.bf16.msra.mxu0 %v2734
    %2898 = vmatpush.bf16.msra.mxu0 %v2733
    %2899 = vmatmul.bf16.gmra.mxu0 %v2302
    %v2900 = vpop.f32.mrf.mxu0
    %v2901 = vadd.f32 %v2887, %v2900
    %v2902 = vpop.f32.mrf.mxu0
    %v2903 = vadd.f32 %v2889, %v2902
    %2904 = vdwg.mxu0
    %2905 = vmatpush.bf16.msra.mxu0 %v2748
    %2906 = vmatpush.bf16.msra.mxu0 %v2747
    %2907 = vmatpush.bf16.msra.mxu0 %v2746
    %2908 = vmatpush.bf16.msra.mxu0 %v2745
    %2909 = vmatpush.bf16.msra.mxu0 %v2744
    %2910 = vmatpush.bf16.msra.mxu0 %v2743
    %2911 = vmatpush.bf16.msra.mxu0 %v2742
    %2912 = vmatpush.bf16.msra.mxu0 %v2741
    %2913 = vmatmul.bf16.gmra.mxu0 %v2303
    %v2914 = vpop.f32.mrf.mxu0
    %v2915 = vadd.f32 %v2901, %v2914
    %v2916 = vpop.f32.mrf.mxu0
    %v2917 = vadd.f32 %v2903, %v2916
    %2918 = vdwg.mxu0
    %2919 = vmatpush.bf16.msra.mxu0 %v2756
    %2920 = vmatpush.bf16.msra.mxu0 %v2755
    %2921 = vmatpush.bf16.msra.mxu0 %v2754
    %2922 = vmatpush.bf16.msra.mxu0 %v2753
    %2923 = vmatpush.bf16.msra.mxu0 %v2752
    %2924 = vmatpush.bf16.msra.mxu0 %v2751
    %2925 = vmatpush.bf16.msra.mxu0 %v2750
    %2926 = vmatpush.bf16.msra.mxu0 %v2749
    %2927 = vmatmul.bf16.gmra.mxu0 %v2304
    %v2928 = vpop.f32.mrf.mxu0
    %v2929 = vadd.f32 %v2915, %v2928
    %v2930 = vpop.f32.mrf.mxu0
    %v2931 = vadd.f32 %v2917, %v2930
    %2932 = vdwg.mxu0
    %2933 = vst [vmem:[#allocation13] sm:$0xff] %v2929
    %2934 = vst [vmem:[#allocation13 + $0x8] sm:$0xff] %v2931
    // Predicated region
    $region54: #{tpu_custom_call.1} parent=1 // pred_check
      _
    $region55: #{tpu_custom_call.1} parent=1 // pred_check_branch
      %2936 = sbr.rel (0) target = $region57
    $region56: #{tpu_custom_call.1} parent=1 // pred_region
      %2938 = vsyncadd [#allocation4], 0
      %s2939 = sshll.u32 [#allocation13], 4
      %s2940 = int_to_ptr.vmem [resolvable:$true] %s2939
      %s2941 = sshll.u32 %s7, 4
      %s2942 = int_to_ptr.hbm [resolvable:$true] %s2941
      %2947 = dma.vmem_to_hbm [thread:$0]  %s2940, 256, %s2942, [#allocation4], 128, 128, 8
    $region57: #{tpu_custom_call.1} parent=1 // pred_fallthru
      _
    // Predicated region
    $region58: #{tpu_custom_call.1} parent=1 // pred_check
      _
    $region59: #{tpu_custom_call.1} parent=1 // pred_check_branch
      %2949 = sbr.rel (0) target = $region61
    $region60: #{tpu_custom_call.1} parent=1 // pred_region
      %2951 = dma.done [#allocation4], 256
    $region61: #{tpu_custom_call.1} parent=1 // pred_fallthru
      _
    %2952 = vsyncpa [#allocation3], 1
    %2953 = vsyncpa [#allocation6], 1
    %2954 = vsyncpa [#allocation9], 1
    %2955 = vsyncpa [#allocation12], 1
    %2956 = vsyncpa [#allocation4], 1

</llo_original>
